<compile_context>
chip_gen: v6e
topology: v6e:2x2x1
jax: 0.10.0
libtpu: 0.0.40
codegen_flags: <defaults>
</compile_context>

<pallas_src>
import functools

import jax
import jax.numpy as jnp
from jax.experimental import pallas as pl
from jax.experimental.pallas import tpu as pltpu

HIDDEN_SIZE = 64
INPUT_SIZE = 27
NUM_CLASSES = 27
FC1_SIZE = 128
GATE_PAD = 128     # each LSTM gate zero-padded from 64 -> 128 lanes (vreg aligned)
OUT_PAD = 128      # logits padded 27 -> 128 lanes (lane-dense, unmasked stores)


def _lstm_mlp_kernel(x_ref, wih_ref, whh_ref, b_ref, w1_ref, b1_ref, w2_ref, b2_ref,
                     out_ref, h_all_scr, *, seq_len, batch, hp):
    """Single grid step; all operands resident in VMEM (~0.3 MB total)."""
    # ---- 1) batched input projection (no sequential dependence) -------------
    # x_ref: (T*B, I) time-major rows. Bias folded in once (not per step).
    gx = jnp.dot(x_ref[...], wih_ref[...],
                 preferred_element_type=jnp.float32) + b_ref[...]      # (T*B, 4*HP)

    whh = whh_ref[...]                                                 # (HP, 4*HP)
    h = jnp.zeros((batch, hp), jnp.float32)
    c = jnp.zeros((batch, hp), jnp.float32)

    # ---- 2) recurrence: fully unrolled (T is small & static) ----------------
    # Padded gate lanes stay exactly zero through the recurrence (zero weight
    # cols/rows + zero bias), so no re-masking is needed.
    # TODO(synk): for long sequences switch to lax.fori_loop + VMEM state scratch.
    for t in range(seq_len):
        gates = gx[t * batch:(t + 1) * batch, :] + jnp.dot(
            h, whh, preferred_element_type=jnp.float32)                # (B, 4*HP)
        # 128-lane-aligned gate slices: whole-vreg views, no XLU relayout.
        i_g = jax.nn.sigmoid(gates[:, 0 * hp:1 * hp])
        f_g = jax.nn.sigmoid(gates[:, 1 * hp:2 * hp])
        g_g = jnp.tanh(gates[:, 2 * hp:3 * hp])
        o_g = jax.nn.sigmoid(gates[:, 3 * hp:4 * hp])
        c = f_g * c + i_g * g_g
        h = o_g * jnp.tanh(c)
        h_all_scr[t * batch:(t + 1) * batch, :] = h

    # ---- 3) MLP head, batched over all timesteps (out of the serial loop) ---
    y = jnp.maximum(h_all_scr[...], 0.0)                               # (T*B, HP)
    y = jnp.dot(y, w1_ref[...], preferred_element_type=jnp.float32) + b1_ref[...]
    y = jnp.maximum(y, 0.0)
    y = jnp.dot(y, w2_ref[...], preferred_element_type=jnp.float32) + b2_ref[...]
    out_ref[...] = y.astype(out_ref.dtype)                             # (T*B, 128)


def _pad_gate_cols(w, h, hp):
    """(rows, 4h) -> (rows, 4hp): zero-pad each of the 4 gate blocks to hp lanes."""
    parts = []
    for g in range(4):
        blk = w[:, g * h:(g + 1) * h]
        parts.append(jnp.pad(blk, ((0, 0), (0, hp - h))))
    return jnp.concatenate(parts, axis=1)


def lstm1_forward(x, params):
    """x: (B, T, I) float32 -> (B, T, num_classes) float32 (matches PyTorch)."""
    B, T, I = x.shape
    H = params["whh"].shape[0]
    C = params["b2"].shape[-1]
    HP, CP = GATE_PAD, OUT_PAD

    # Layout prep (cheap, XLA side): time-major flattened input, padded weights.
    x_flat = jnp.transpose(x, (1, 0, 2)).reshape(T * B, I)             # rows = t*B + b
    wih_p = _pad_gate_cols(params["wih"], H, HP)                       # (I, 4*HP)
    whh_p = _pad_gate_cols(jnp.pad(params["whh"], ((0, HP - H), (0, 0))), H, HP)  # (HP, 4*HP)
    b_p = _pad_gate_cols(params["b"], H, HP)                           # (1, 4*HP)
    w1_p = jnp.pad(params["w1"], ((0, HP - H), (0, 0)))                # (HP, F)
    w2_p = jnp.pad(params["w2"], ((0, 0), (0, CP - C)))                # (F, CP)
    b2_p = jnp.pad(params["b2"], ((0, 0), (0, CP - C)))                # (1, CP)

    kernel = functools.partial(_lstm_mlp_kernel, seq_len=T, batch=B, hp=HP)

    out_flat = pl.pallas_call(
        kernel,
        out_shape=jax.ShapeDtypeStruct((T * B, CP), jnp.float32),
        grid_spec=pltpu.PrefetchScalarGridSpec(
            num_scalar_prefetch=0,
            grid=(1,),                      # single invocation: no per-step grid overhead
            in_specs=[
                pl.BlockSpec((T * B, I), lambda i: (0, 0)),
                pl.BlockSpec(wih_p.shape, lambda i: (0, 0)),
                pl.BlockSpec(whh_p.shape, lambda i: (0, 0)),
                pl.BlockSpec(b_p.shape, lambda i: (0, 0)),
                pl.BlockSpec(w1_p.shape, lambda i: (0, 0)),
                pl.BlockSpec(params["b1"].shape, lambda i: (0, 0)),
                pl.BlockSpec(w2_p.shape, lambda i: (0, 0)),
                pl.BlockSpec(b2_p.shape, lambda i: (0, 0)),
            ],
            out_specs=pl.BlockSpec((T * B, CP), lambda i: (0, 0)),
            scratch_shapes=[pltpu.VMEM((T * B, HP), jnp.float32)],     # h for all steps
        ),
        compiler_params=pltpu.CompilerParams(dimension_semantics=("arbitrary",)),
    )(x_flat, wih_p, whh_p, b_p, w1_p, params["b1"], w2_p, b2_p)

    # Un-pad logits and restore (B, T, C) batch_first layout.
    out = out_flat[:, :C].reshape(T, B, C)
    return jnp.transpose(out, (1, 0, 2))


def init_params(key, input_size=INPUT_SIZE, hidden_size=HIDDEN_SIZE,
                fc1_size=FC1_SIZE, num_classes=NUM_CLASSES):
    """Deterministic parameter init mimicking PyTorch default scales."""
    ks = jax.random.split(key, 10)
    H, I = hidden_size, input_size
    s_lstm = 1.0 / jnp.sqrt(H)
    s_fc1 = 1.0 / jnp.sqrt(H)
    s_fc2 = 1.0 / jnp.sqrt(fc1_size)

    # stored already transposed for right-multiplication: x @ W
    wih = jax.random.uniform(ks[0], (I, 4 * H), jnp.float32, -s_lstm, s_lstm)
    whh = jax.random.uniform(ks[1], (H, 4 * H), jnp.float32, -s_lstm, s_lstm)
    b_ih = jax.random.uniform(ks[2], (1, 4 * H), jnp.float32, -s_lstm, s_lstm)
    b_hh = jax.random.uniform(ks[3], (1, 4 * H), jnp.float32, -s_lstm, s_lstm)
    w1 = jax.random.uniform(ks[4], (H, fc1_size), jnp.float32, -s_fc1, s_fc1)
    b1 = jax.random.uniform(ks[5], (1, fc1_size), jnp.float32, -s_fc1, s_fc1)
    w2 = jax.random.uniform(ks[6], (fc1_size, num_classes), jnp.float32, -s_fc2, s_fc2)
    b2 = jax.random.uniform(ks[7], (1, num_classes), jnp.float32, -s_fc2, s_fc2)

    return {"wih": wih, "whh": whh, "b": b_ih + b_hh,
            "w1": w1, "b1": b1, "w2": w2, "b2": b2}


def lstm1_reference(x, params):
    """Pure-JAX reference of the PyTorch forward for validation."""
    B, T, I = x.shape
    H = params["whh"].shape[0]

    def step(carry, x_t):
        h, c = carry
        gates = x_t @ params["wih"] + h @ params["whh"] + params["b"]
        i_g = jax.nn.sigmoid(gates[:, 0 * H:1 * H])
        f_g = jax.nn.sigmoid(gates[:, 1 * H:2 * H])
        g_g = jnp.tanh(gates[:, 2 * H:3 * H])
        o_g = jax.nn.sigmoid(gates[:, 3 * H:4 * H])
        c_new = f_g * c + i_g * g_g
        h_new = o_g * jnp.tanh(c_new)
        return (h_new, c_new), h_new

    h0 = jnp.zeros((B, H), jnp.float32)
    c0 = jnp.zeros((B, H), jnp.float32)
    _, hs = jax.lax.scan(step, (h0, c0), jnp.transpose(x, (1, 0, 2)))  # (T, B, H)
    out = jnp.transpose(hs, (1, 0, 2))          # (B, T, H)
    out = jnp.maximum(out, 0.0)
    out = out @ params["w1"] + params["b1"]
    out = jnp.maximum(out, 0.0)
    out = out @ params["w2"] + params["b2"]
    return out


if __name__ == "__main__":
    key = jax.random.PRNGKey(0)
    k_param, k_x = jax.random.split(key)

    batch, seq = 2, 8
    params = init_params(k_param)
    x = jax.random.normal(k_x, (batch, seq, INPUT_SIZE), jnp.float32)

    out = lstm1_forward(x, params)
    out = jax.block_until_ready(out)

    ref = jax.block_until_ready(lstm1_reference(x, params))
    assert out.shape == (batch, seq, NUM_CLASSES)
    assert jnp.allclose(out, ref, atol=2e-5, rtol=2e-5)

    print("KERNEL_OK")
</pallas_src>

<mosaic_0001>
module attributes {stable_mosaic.version = 11 : i64} {
  func.func @_lstm_mlp_kernel(%arg0: i32, %arg1: memref<16x27xf32, #tpu.memory_space<vmem>>, %arg2: memref<27x512xf32, #tpu.memory_space<vmem>>, %arg3: memref<128x512xf32, #tpu.memory_space<vmem>>, %arg4: memref<1x512xf32, #tpu.memory_space<vmem>>, %arg5: memref<128x128xf32, #tpu.memory_space<vmem>>, %arg6: memref<1x128xf32, #tpu.memory_space<vmem>>, %arg7: memref<128x128xf32, #tpu.memory_space<vmem>>, %arg8: memref<1x128xf32, #tpu.memory_space<vmem>>, %arg9: memref<16x128xf32, #tpu.memory_space<vmem>>, %arg10: memref<16x128xf32, #tpu.memory_space<vmem>>) attributes {dimension_semantics = [#tpu.dimension_semantics<arbitrary>], iteration_bounds = array<i64: 1>, scalar_prefetch = 0 : i64, scratch_operands = 1 : i64, tpu.core_type = #tpu.core_type<tc>, window_params = [{pipeline_mode = #tpu.pipeline_mode<synchronous>, transform_indices = @transform_0, window_bounds = array<i64: 16, 27>}, {pipeline_mode = #tpu.pipeline_mode<synchronous>, transform_indices = @transform_1, window_bounds = array<i64: 27, 512>}, {pipeline_mode = #tpu.pipeline_mode<synchronous>, transform_indices = @transform_2, window_bounds = array<i64: 128, 512>}, {pipeline_mode = #tpu.pipeline_mode<synchronous>, transform_indices = @transform_3, window_bounds = array<i64: 1, 512>}, {pipeline_mode = #tpu.pipeline_mode<synchronous>, transform_indices = @transform_4, window_bounds = array<i64: 128, 128>}, {pipeline_mode = #tpu.pipeline_mode<synchronous>, transform_indices = @transform_5, window_bounds = array<i64: 1, 128>}, {pipeline_mode = #tpu.pipeline_mode<synchronous>, transform_indices = @transform_6, window_bounds = array<i64: 128, 128>}, {pipeline_mode = #tpu.pipeline_mode<synchronous>, transform_indices = @transform_7, window_bounds = array<i64: 1, 128>}, {pipeline_mode = #tpu.pipeline_mode<synchronous>, transform_indices = @transform_8, window_bounds = array<i64: 16, 128>}]} {
    %c0 = arith.constant 0 : index
    %c0_0 = arith.constant 0 : index
    %0 = vector.load %arg1[%c0, %c0_0] : memref<16x27xf32, #tpu.memory_space<vmem>>, vector<16x27xf32>
    %c0_1 = arith.constant 0 : index
    %c0_2 = arith.constant 0 : index
    %1 = vector.load %arg2[%c0_1, %c0_2] : memref<27x512xf32, #tpu.memory_space<vmem>>, vector<27x512xf32>
    %cst = arith.constant dense<0.000000e+00> : vector<16x512xf32>
    %2 = tpu.matmul %0, %1, %cst {dimension_numbers = #tpu.dot_dimension_numbers<[1], [0], [0], [1], [0, 0, 1, 1], [], []>} : vector<16x27xf32>, vector<27x512xf32>, vector<16x512xf32> -> vector<16x512xf32>
    %c0_3 = arith.constant 0 : index
    %c0_4 = arith.constant 0 : index
    %3 = vector.load %arg4[%c0_3, %c0_4] : memref<1x512xf32, #tpu.memory_space<vmem>>, vector<1x512xf32>
    %4 = vector.broadcast %3 : vector<1x512xf32> to vector<16x512xf32>
    %5 = arith.addf %2, %4 : vector<16x512xf32>
    %c0_5 = arith.constant 0 : index
    %c0_6 = arith.constant 0 : index
    %6 = vector.load %arg3[%c0_5, %c0_6] : memref<128x512xf32, #tpu.memory_space<vmem>>, vector<128x512xf32>
    %cst_7 = arith.constant 0.000000e+00 : f32
    %7 = vector.broadcast %cst_7 : f32 to vector<2x128xf32>
    %cst_8 = arith.constant 0.000000e+00 : f32
    %8 = vector.broadcast %cst_8 : f32 to vector<2x128xf32>
    %9 = vector.extract_strided_slice %5 {offsets = [0, 0], sizes = [2, 512], strides = [1, 1]} : vector<16x512xf32> to vector<2x512xf32>
    %cst_9 = arith.constant dense<0.000000e+00> : vector<2x512xf32>
    %10 = tpu.matmul %7, %6, %cst_9 {dimension_numbers = #tpu.dot_dimension_numbers<[1], [0], [0], [1], [0, 0, 1, 1], [], []>} : vector<2x128xf32>, vector<128x512xf32>, vector<2x512xf32> -> vector<2x512xf32>
    %11 = arith.addf %9, %10 : vector<2x512xf32>
    %12 = vector.extract_strided_slice %11 {offsets = [0, 0], sizes = [2, 128], strides = [1, 1]} : vector<2x512xf32> to vector<2x128xf32>
    %13 = arith.negf %12 : vector<2x128xf32>
    %14 = math.exp %13 : vector<2x128xf32>
    %cst_10 = arith.constant 1.000000e+00 : f32
    %15 = vector.broadcast %cst_10 : f32 to vector<2x128xf32>
    %16 = arith.addf %15, %14 : vector<2x128xf32>
    %17 = arith.divf %15, %16 : vector<2x128xf32>
    %18 = vector.extract_strided_slice %11 {offsets = [0, 128], sizes = [2, 128], strides = [1, 1]} : vector<2x512xf32> to vector<2x128xf32>
    %19 = arith.negf %18 : vector<2x128xf32>
    %20 = math.exp %19 : vector<2x128xf32>
    %cst_11 = arith.constant 1.000000e+00 : f32
    %21 = vector.broadcast %cst_11 : f32 to vector<2x128xf32>
    %22 = arith.addf %21, %20 : vector<2x128xf32>
    %23 = arith.divf %21, %22 : vector<2x128xf32>
    %24 = vector.extract_strided_slice %11 {offsets = [0, 256], sizes = [2, 128], strides = [1, 1]} : vector<2x512xf32> to vector<2x128xf32>
    %25 = math.tanh %24 : vector<2x128xf32>
    %26 = vector.extract_strided_slice %11 {offsets = [0, 384], sizes = [2, 128], strides = [1, 1]} : vector<2x512xf32> to vector<2x128xf32>
    %27 = arith.negf %26 : vector<2x128xf32>
    %28 = math.exp %27 : vector<2x128xf32>
    %cst_12 = arith.constant 1.000000e+00 : f32
    %29 = vector.broadcast %cst_12 : f32 to vector<2x128xf32>
    %30 = arith.addf %29, %28 : vector<2x128xf32>
    %31 = arith.divf %29, %30 : vector<2x128xf32>
    %32 = arith.mulf %23, %8 : vector<2x128xf32>
    %33 = arith.mulf %17, %25 : vector<2x128xf32>
    %34 = arith.addf %32, %33 : vector<2x128xf32>
    %35 = math.tanh %34 : vector<2x128xf32>
    %36 = arith.mulf %31, %35 : vector<2x128xf32>
    %c0_13 = arith.constant 0 : index
    %c0_14 = arith.constant 0 : index
    %37 = vector.load %arg10[%c0_13, %c0_14] : memref<16x128xf32, #tpu.memory_space<vmem>>, vector<2x128xf32>
    tpu.vector_store %arg10[%c0_13, %c0_14], %36 {strides = array<i32>} : memref<16x128xf32, #tpu.memory_space<vmem>>, vector<2x128xf32>,
    %38 = vector.extract_strided_slice %5 {offsets = [2, 0], sizes = [2, 512], strides = [1, 1]} : vector<16x512xf32> to vector<2x512xf32>
    %cst_15 = arith.constant dense<0.000000e+00> : vector<2x512xf32>
    %39 = tpu.matmul %36, %6, %cst_15 {dimension_numbers = #tpu.dot_dimension_numbers<[1], [0], [0], [1], [0, 0, 1, 1], [], []>} : vector<2x128xf32>, vector<128x512xf32>, vector<2x512xf32> -> vector<2x512xf32>
    %40 = arith.addf %38, %39 : vector<2x512xf32>
    %41 = vector.extract_strided_slice %40 {offsets = [0, 0], sizes = [2, 128], strides = [1, 1]} : vector<2x512xf32> to vector<2x128xf32>
    %42 = arith.negf %41 : vector<2x128xf32>
    %43 = math.exp %42 : vector<2x128xf32>
    %cst_16 = arith.constant 1.000000e+00 : f32
    %44 = vector.broadcast %cst_16 : f32 to vector<2x128xf32>
    %45 = arith.addf %44, %43 : vector<2x128xf32>
    %46 = arith.divf %44, %45 : vector<2x128xf32>
    %47 = vector.extract_strided_slice %40 {offsets = [0, 128], sizes = [2, 128], strides = [1, 1]} : vector<2x512xf32> to vector<2x128xf32>
    %48 = arith.negf %47 : vector<2x128xf32>
    %49 = math.exp %48 : vector<2x128xf32>
    %cst_17 = arith.constant 1.000000e+00 : f32
    %50 = vector.broadcast %cst_17 : f32 to vector<2x128xf32>
    %51 = arith.addf %50, %49 : vector<2x128xf32>
    %52 = arith.divf %50, %51 : vector<2x128xf32>
    %53 = vector.extract_strided_slice %40 {offsets = [0, 256], sizes = [2, 128], strides = [1, 1]} : vector<2x512xf32> to vector<2x128xf32>
    %54 = math.tanh %53 : vector<2x128xf32>
    %55 = vector.extract_strided_slice %40 {offsets = [0, 384], sizes = [2, 128], strides = [1, 1]} : vector<2x512xf32> to vector<2x128xf32>
    %56 = arith.negf %55 : vector<2x128xf32>
    %57 = math.exp %56 : vector<2x128xf32>
    %cst_18 = arith.constant 1.000000e+00 : f32
    %58 = vector.broadcast %cst_18 : f32 to vector<2x128xf32>
    %59 = arith.addf %58, %57 : vector<2x128xf32>
    %60 = arith.divf %58, %59 : vector<2x128xf32>
    %61 = arith.mulf %52, %34 : vector<2x128xf32>
    %62 = arith.mulf %46, %54 : vector<2x128xf32>
    %63 = arith.addf %61, %62 : vector<2x128xf32>
    %64 = math.tanh %63 : vector<2x128xf32>
    %65 = arith.mulf %60, %64 : vector<2x128xf32>
    %c2 = arith.constant 2 : index
    %c0_19 = arith.constant 0 : index
    %66 = vector.load %arg10[%c2, %c0_19] : memref<16x128xf32, #tpu.memory_space<vmem>>, vector<2x128xf32>
    tpu.vector_store %arg10[%c2, %c0_19], %65 {strides = array<i32>} : memref<16x128xf32, #tpu.memory_space<vmem>>, vector<2x128xf32>,
    %67 = vector.extract_strided_slice %5 {offsets = [4, 0], sizes = [2, 512], strides = [1, 1]} : vector<16x512xf32> to vector<2x512xf32>
    %cst_20 = arith.constant dense<0.000000e+00> : vector<2x512xf32>
    %68 = tpu.matmul %65, %6, %cst_20 {dimension_numbers = #tpu.dot_dimension_numbers<[1], [0], [0], [1], [0, 0, 1, 1], [], []>} : vector<2x128xf32>, vector<128x512xf32>, vector<2x512xf32> -> vector<2x512xf32>
    %69 = arith.addf %67, %68 : vector<2x512xf32>
    %70 = vector.extract_strided_slice %69 {offsets = [0, 0], sizes = [2, 128], strides = [1, 1]} : vector<2x512xf32> to vector<2x128xf32>
    %71 = arith.negf %70 : vector<2x128xf32>
    %72 = math.exp %71 : vector<2x128xf32>
    %cst_21 = arith.constant 1.000000e+00 : f32
    %73 = vector.broadcast %cst_21 : f32 to vector<2x128xf32>
    %74 = arith.addf %73, %72 : vector<2x128xf32>
    %75 = arith.divf %73, %74 : vector<2x128xf32>
    %76 = vector.extract_strided_slice %69 {offsets = [0, 128], sizes = [2, 128], strides = [1, 1]} : vector<2x512xf32> to vector<2x128xf32>
    %77 = arith.negf %76 : vector<2x128xf32>
    %78 = math.exp %77 : vector<2x128xf32>
    %cst_22 = arith.constant 1.000000e+00 : f32
    %79 = vector.broadcast %cst_22 : f32 to vector<2x128xf32>
    %80 = arith.addf %79, %78 : vector<2x128xf32>
    %81 = arith.divf %79, %80 : vector<2x128xf32>
    %82 = vector.extract_strided_slice %69 {offsets = [0, 256], sizes = [2, 128], strides = [1, 1]} : vector<2x512xf32> to vector<2x128xf32>
    %83 = math.tanh %82 : vector<2x128xf32>
    %84 = vector.extract_strided_slice %69 {offsets = [0, 384], sizes = [2, 128], strides = [1, 1]} : vector<2x512xf32> to vector<2x128xf32>
    %85 = arith.negf %84 : vector<2x128xf32>
    %86 = math.exp %85 : vector<2x128xf32>
    %cst_23 = arith.constant 1.000000e+00 : f32
    %87 = vector.broadcast %cst_23 : f32 to vector<2x128xf32>
    %88 = arith.addf %87, %86 : vector<2x128xf32>
    %89 = arith.divf %87, %88 : vector<2x128xf32>
    %90 = arith.mulf %81, %63 : vector<2x128xf32>
    %91 = arith.mulf %75, %83 : vector<2x128xf32>
    %92 = arith.addf %90, %91 : vector<2x128xf32>
    %93 = math.tanh %92 : vector<2x128xf32>
    %94 = arith.mulf %89, %93 : vector<2x128xf32>
    %c4 = arith.constant 4 : index
    %c0_24 = arith.constant 0 : index
    %95 = vector.load %arg10[%c4, %c0_24] : memref<16x128xf32, #tpu.memory_space<vmem>>, vector<2x128xf32>
    tpu.vector_store %arg10[%c4, %c0_24], %94 {strides = array<i32>} : memref<16x128xf32, #tpu.memory_space<vmem>>, vector<2x128xf32>,
    %96 = vector.extract_strided_slice %5 {offsets = [6, 0], sizes = [2, 512], strides = [1, 1]} : vector<16x512xf32> to vector<2x512xf32>
    %cst_25 = arith.constant dense<0.000000e+00> : vector<2x512xf32>
    %97 = tpu.matmul %94, %6, %cst_25 {dimension_numbers = #tpu.dot_dimension_numbers<[1], [0], [0], [1], [0, 0, 1, 1], [], []>} : vector<2x128xf32>, vector<128x512xf32>, vector<2x512xf32> -> vector<2x512xf32>
    %98 = arith.addf %96, %97 : vector<2x512xf32>
    %99 = vector.extract_strided_slice %98 {offsets = [0, 0], sizes = [2, 128], strides = [1, 1]} : vector<2x512xf32> to vector<2x128xf32>
    %100 = arith.negf %99 : vector<2x128xf32>
    %101 = math.exp %100 : vector<2x128xf32>
    %cst_26 = arith.constant 1.000000e+00 : f32
    %102 = vector.broadcast %cst_26 : f32 to vector<2x128xf32>
    %103 = arith.addf %102, %101 : vector<2x128xf32>
    %104 = arith.divf %102, %103 : vector<2x128xf32>
    %105 = vector.extract_strided_slice %98 {offsets = [0, 128], sizes = [2, 128], strides = [1, 1]} : vector<2x512xf32> to vector<2x128xf32>
    %106 = arith.negf %105 : vector<2x128xf32>
    %107 = math.exp %106 : vector<2x128xf32>
    %cst_27 = arith.constant 1.000000e+00 : f32
    %108 = vector.broadcast %cst_27 : f32 to vector<2x128xf32>
    %109 = arith.addf %108, %107 : vector<2x128xf32>
    %110 = arith.divf %108, %109 : vector<2x128xf32>
    %111 = vector.extract_strided_slice %98 {offsets = [0, 256], sizes = [2, 128], strides = [1, 1]} : vector<2x512xf32> to vector<2x128xf32>
    %112 = math.tanh %111 : vector<2x128xf32>
    %113 = vector.extract_strided_slice %98 {offsets = [0, 384], sizes = [2, 128], strides = [1, 1]} : vector<2x512xf32> to vector<2x128xf32>
    %114 = arith.negf %113 : vector<2x128xf32>
    %115 = math.exp %114 : vector<2x128xf32>
    %cst_28 = arith.constant 1.000000e+00 : f32
    %116 = vector.broadcast %cst_28 : f32 to vector<2x128xf32>
    %117 = arith.addf %116, %115 : vector<2x128xf32>
    %118 = arith.divf %116, %117 : vector<2x128xf32>
    %119 = arith.mulf %110, %92 : vector<2x128xf32>
    %120 = arith.mulf %104, %112 : vector<2x128xf32>
    %121 = arith.addf %119, %120 : vector<2x128xf32>
    %122 = math.tanh %121 : vector<2x128xf32>
    %123 = arith.mulf %118, %122 : vector<2x128xf32>
    %c6 = arith.constant 6 : index
    %c0_29 = arith.constant 0 : index
    %124 = vector.load %arg10[%c6, %c0_29] : memref<16x128xf32, #tpu.memory_space<vmem>>, vector<2x128xf32>
    tpu.vector_store %arg10[%c6, %c0_29], %123 {strides = array<i32>} : memref<16x128xf32, #tpu.memory_space<vmem>>, vector<2x128xf32>,
    %125 = vector.extract_strided_slice %5 {offsets = [8, 0], sizes = [2, 512], strides = [1, 1]} : vector<16x512xf32> to vector<2x512xf32>
    %cst_30 = arith.constant dense<0.000000e+00> : vector<2x512xf32>
    %126 = tpu.matmul %123, %6, %cst_30 {dimension_numbers = #tpu.dot_dimension_numbers<[1], [0], [0], [1], [0, 0, 1, 1], [], []>} : vector<2x128xf32>, vector<128x512xf32>, vector<2x512xf32> -> vector<2x512xf32>
    %127 = arith.addf %125, %126 : vector<2x512xf32>
    %128 = vector.extract_strided_slice %127 {offsets = [0, 0], sizes = [2, 128], strides = [1, 1]} : vector<2x512xf32> to vector<2x128xf32>
    %129 = arith.negf %128 : vector<2x128xf32>
    %130 = math.exp %129 : vector<2x128xf32>
    %cst_31 = arith.constant 1.000000e+00 : f32
    %131 = vector.broadcast %cst_31 : f32 to vector<2x128xf32>
    %132 = arith.addf %131, %130 : vector<2x128xf32>
    %133 = arith.divf %131, %132 : vector<2x128xf32>
    %134 = vector.extract_strided_slice %127 {offsets = [0, 128], sizes = [2, 128], strides = [1, 1]} : vector<2x512xf32> to vector<2x128xf32>
    %135 = arith.negf %134 : vector<2x128xf32>
    %136 = math.exp %135 : vector<2x128xf32>
    %cst_32 = arith.constant 1.000000e+00 : f32
    %137 = vector.broadcast %cst_32 : f32 to vector<2x128xf32>
    %138 = arith.addf %137, %136 : vector<2x128xf32>
    %139 = arith.divf %137, %138 : vector<2x128xf32>
    %140 = vector.extract_strided_slice %127 {offsets = [0, 256], sizes = [2, 128], strides = [1, 1]} : vector<2x512xf32> to vector<2x128xf32>
    %141 = math.tanh %140 : vector<2x128xf32>
    %142 = vector.extract_strided_slice %127 {offsets = [0, 384], sizes = [2, 128], strides = [1, 1]} : vector<2x512xf32> to vector<2x128xf32>
    %143 = arith.negf %142 : vector<2x128xf32>
    %144 = math.exp %143 : vector<2x128xf32>
    %cst_33 = arith.constant 1.000000e+00 : f32
    %145 = vector.broadcast %cst_33 : f32 to vector<2x128xf32>
    %146 = arith.addf %145, %144 : vector<2x128xf32>
    %147 = arith.divf %145, %146 : vector<2x128xf32>
    %148 = arith.mulf %139, %121 : vector<2x128xf32>
    %149 = arith.mulf %133, %141 : vector<2x128xf32>
    %150 = arith.addf %148, %149 : vector<2x128xf32>
    %151 = math.tanh %150 : vector<2x128xf32>
    %152 = arith.mulf %147, %151 : vector<2x128xf32>
    %c8 = arith.constant 8 : index
    %c0_34 = arith.constant 0 : index
    %153 = vector.load %arg10[%c8, %c0_34] : memref<16x128xf32, #tpu.memory_space<vmem>>, vector<2x128xf32>
    tpu.vector_store %arg10[%c8, %c0_34], %152 {strides = array<i32>} : memref<16x128xf32, #tpu.memory_space<vmem>>, vector<2x128xf32>,
    %154 = vector.extract_strided_slice %5 {offsets = [10, 0], sizes = [2, 512], strides = [1, 1]} : vector<16x512xf32> to vector<2x512xf32>
    %cst_35 = arith.constant dense<0.000000e+00> : vector<2x512xf32>
    %155 = tpu.matmul %152, %6, %cst_35 {dimension_numbers = #tpu.dot_dimension_numbers<[1], [0], [0], [1], [0, 0, 1, 1], [], []>} : vector<2x128xf32>, vector<128x512xf32>, vector<2x512xf32> -> vector<2x512xf32>
    %156 = arith.addf %154, %155 : vector<2x512xf32>
    %157 = vector.extract_strided_slice %156 {offsets = [0, 0], sizes = [2, 128], strides = [1, 1]} : vector<2x512xf32> to vector<2x128xf32>
    %158 = arith.negf %157 : vector<2x128xf32>
    %159 = math.exp %158 : vector<2x128xf32>
    %cst_36 = arith.constant 1.000000e+00 : f32
    %160 = vector.broadcast %cst_36 : f32 to vector<2x128xf32>
    %161 = arith.addf %160, %159 : vector<2x128xf32>
    %162 = arith.divf %160, %161 : vector<2x128xf32>
    %163 = vector.extract_strided_slice %156 {offsets = [0, 128], sizes = [2, 128], strides = [1, 1]} : vector<2x512xf32> to vector<2x128xf32>
    %164 = arith.negf %163 : vector<2x128xf32>
    %165 = math.exp %164 : vector<2x128xf32>
    %cst_37 = arith.constant 1.000000e+00 : f32
    %166 = vector.broadcast %cst_37 : f32 to vector<2x128xf32>
    %167 = arith.addf %166, %165 : vector<2x128xf32>
    %168 = arith.divf %166, %167 : vector<2x128xf32>
    %169 = vector.extract_strided_slice %156 {offsets = [0, 256], sizes = [2, 128], strides = [1, 1]} : vector<2x512xf32> to vector<2x128xf32>
    %170 = math.tanh %169 : vector<2x128xf32>
    %171 = vector.extract_strided_slice %156 {offsets = [0, 384], sizes = [2, 128], strides = [1, 1]} : vector<2x512xf32> to vector<2x128xf32>
    %172 = arith.negf %171 : vector<2x128xf32>
    %173 = math.exp %172 : vector<2x128xf32>
    %cst_38 = arith.constant 1.000000e+00 : f32
    %174 = vector.broadcast %cst_38 : f32 to vector<2x128xf32>
    %175 = arith.addf %174, %173 : vector<2x128xf32>
    %176 = arith.divf %174, %175 : vector<2x128xf32>
    %177 = arith.mulf %168, %150 : vector<2x128xf32>
    %178 = arith.mulf %162, %170 : vector<2x128xf32>
    %179 = arith.addf %177, %178 : vector<2x128xf32>
    %180 = math.tanh %179 : vector<2x128xf32>
    %181 = arith.mulf %176, %180 : vector<2x128xf32>
    %c10 = arith.constant 10 : index
    %c0_39 = arith.constant 0 : index
    %182 = vector.load %arg10[%c10, %c0_39] : memref<16x128xf32, #tpu.memory_space<vmem>>, vector<2x128xf32>
    tpu.vector_store %arg10[%c10, %c0_39], %181 {strides = array<i32>} : memref<16x128xf32, #tpu.memory_space<vmem>>, vector<2x128xf32>,
    %183 = vector.extract_strided_slice %5 {offsets = [12, 0], sizes = [2, 512], strides = [1, 1]} : vector<16x512xf32> to vector<2x512xf32>
    %cst_40 = arith.constant dense<0.000000e+00> : vector<2x512xf32>
    %184 = tpu.matmul %181, %6, %cst_40 {dimension_numbers = #tpu.dot_dimension_numbers<[1], [0], [0], [1], [0, 0, 1, 1], [], []>} : vector<2x128xf32>, vector<128x512xf32>, vector<2x512xf32> -> vector<2x512xf32>
    %185 = arith.addf %183, %184 : vector<2x512xf32>
    %186 = vector.extract_strided_slice %185 {offsets = [0, 0], sizes = [2, 128], strides = [1, 1]} : vector<2x512xf32> to vector<2x128xf32>
    %187 = arith.negf %186 : vector<2x128xf32>
    %188 = math.exp %187 : vector<2x128xf32>
    %cst_41 = arith.constant 1.000000e+00 : f32
    %189 = vector.broadcast %cst_41 : f32 to vector<2x128xf32>
    %190 = arith.addf %189, %188 : vector<2x128xf32>
    %191 = arith.divf %189, %190 : vector<2x128xf32>
    %192 = vector.extract_strided_slice %185 {offsets = [0, 128], sizes = [2, 128], strides = [1, 1]} : vector<2x512xf32> to vector<2x128xf32>
    %193 = arith.negf %192 : vector<2x128xf32>
    %194 = math.exp %193 : vector<2x128xf32>
    %cst_42 = arith.constant 1.000000e+00 : f32
    %195 = vector.broadcast %cst_42 : f32 to vector<2x128xf32>
    %196 = arith.addf %195, %194 : vector<2x128xf32>
    %197 = arith.divf %195, %196 : vector<2x128xf32>
    %198 = vector.extract_strided_slice %185 {offsets = [0, 256], sizes = [2, 128], strides = [1, 1]} : vector<2x512xf32> to vector<2x128xf32>
    %199 = math.tanh %198 : vector<2x128xf32>
    %200 = vector.extract_strided_slice %185 {offsets = [0, 384], sizes = [2, 128], strides = [1, 1]} : vector<2x512xf32> to vector<2x128xf32>
    %201 = arith.negf %200 : vector<2x128xf32>
    %202 = math.exp %201 : vector<2x128xf32>
    %cst_43 = arith.constant 1.000000e+00 : f32
    %203 = vector.broadcast %cst_43 : f32 to vector<2x128xf32>
    %204 = arith.addf %203, %202 : vector<2x128xf32>
    %205 = arith.divf %203, %204 : vector<2x128xf32>
    %206 = arith.mulf %197, %179 : vector<2x128xf32>
    %207 = arith.mulf %191, %199 : vector<2x128xf32>
    %208 = arith.addf %206, %207 : vector<2x128xf32>
    %209 = math.tanh %208 : vector<2x128xf32>
    %210 = arith.mulf %205, %209 : vector<2x128xf32>
    %c12 = arith.constant 12 : index
    %c0_44 = arith.constant 0 : index
    %211 = vector.load %arg10[%c12, %c0_44] : memref<16x128xf32, #tpu.memory_space<vmem>>, vector<2x128xf32>
    tpu.vector_store %arg10[%c12, %c0_44], %210 {strides = array<i32>} : memref<16x128xf32, #tpu.memory_space<vmem>>, vector<2x128xf32>,
    %212 = vector.extract_strided_slice %5 {offsets = [14, 0], sizes = [2, 512], strides = [1, 1]} : vector<16x512xf32> to vector<2x512xf32>
    %cst_45 = arith.constant dense<0.000000e+00> : vector<2x512xf32>
    %213 = tpu.matmul %210, %6, %cst_45 {dimension_numbers = #tpu.dot_dimension_numbers<[1], [0], [0], [1], [0, 0, 1, 1], [], []>} : vector<2x128xf32>, vector<128x512xf32>, vector<2x512xf32> -> vector<2x512xf32>
    %214 = arith.addf %212, %213 : vector<2x512xf32>
    %215 = vector.extract_strided_slice %214 {offsets = [0, 0], sizes = [2, 128], strides = [1, 1]} : vector<2x512xf32> to vector<2x128xf32>
    %216 = arith.negf %215 : vector<2x128xf32>
    %217 = math.exp %216 : vector<2x128xf32>
    %cst_46 = arith.constant 1.000000e+00 : f32
    %218 = vector.broadcast %cst_46 : f32 to vector<2x128xf32>
    %219 = arith.addf %218, %217 : vector<2x128xf32>
    %220 = arith.divf %218, %219 : vector<2x128xf32>
    %221 = vector.extract_strided_slice %214 {offsets = [0, 128], sizes = [2, 128], strides = [1, 1]} : vector<2x512xf32> to vector<2x128xf32>
    %222 = arith.negf %221 : vector<2x128xf32>
    %223 = math.exp %222 : vector<2x128xf32>
    %cst_47 = arith.constant 1.000000e+00 : f32
    %224 = vector.broadcast %cst_47 : f32 to vector<2x128xf32>
    %225 = arith.addf %224, %223 : vector<2x128xf32>
    %226 = arith.divf %224, %225 : vector<2x128xf32>
    %227 = vector.extract_strided_slice %214 {offsets = [0, 256], sizes = [2, 128], strides = [1, 1]} : vector<2x512xf32> to vector<2x128xf32>
    %228 = math.tanh %227 : vector<2x128xf32>
    %229 = vector.extract_strided_slice %214 {offsets = [0, 384], sizes = [2, 128], strides = [1, 1]} : vector<2x512xf32> to vector<2x128xf32>
    %230 = arith.negf %229 : vector<2x128xf32>
    %231 = math.exp %230 : vector<2x128xf32>
    %cst_48 = arith.constant 1.000000e+00 : f32
    %232 = vector.broadcast %cst_48 : f32 to vector<2x128xf32>
    %233 = arith.addf %232, %231 : vector<2x128xf32>
    %234 = arith.divf %232, %233 : vector<2x128xf32>
    %235 = arith.mulf %226, %208 : vector<2x128xf32>
    %236 = arith.mulf %220, %228 : vector<2x128xf32>
    %237 = arith.addf %235, %236 : vector<2x128xf32>
    %238 = math.tanh %237 : vector<2x128xf32>
    %239 = arith.mulf %234, %238 : vector<2x128xf32>
    %c14 = arith.constant 14 : index
    %c0_49 = arith.constant 0 : index
    %240 = vector.load %arg10[%c14, %c0_49] : memref<16x128xf32, #tpu.memory_space<vmem>>, vector<2x128xf32>
    tpu.vector_store %arg10[%c14, %c0_49], %239 {strides = array<i32>} : memref<16x128xf32, #tpu.memory_space<vmem>>, vector<2x128xf32>,
    %c0_50 = arith.constant 0 : index
    %c0_51 = arith.constant 0 : index
    %241 = vector.load %arg10[%c0_50, %c0_51] : memref<16x128xf32, #tpu.memory_space<vmem>>, vector<16x128xf32>
    %cst_52 = arith.constant 0.000000e+00 : f32
    %242 = vector.broadcast %cst_52 : f32 to vector<16x128xf32>
    %243 = arith.maximumf %241, %242 : vector<16x128xf32>
    %c0_53 = arith.constant 0 : index
    %c0_54 = arith.constant 0 : index
    %244 = vector.load %arg5[%c0_53, %c0_54] : memref<128x128xf32, #tpu.memory_space<vmem>>, vector<128x128xf32>
    %cst_55 = arith.constant dense<0.000000e+00> : vector<16x128xf32>
    %245 = tpu.matmul %243, %244, %cst_55 {dimension_numbers = #tpu.dot_dimension_numbers<[1], [0], [0], [1], [0, 0, 1, 1], [], []>} : vector<16x128xf32>, vector<128x128xf32>, vector<16x128xf32> -> vector<16x128xf32>
    %c0_56 = arith.constant 0 : index
    %c0_57 = arith.constant 0 : index
    %246 = vector.load %arg6[%c0_56, %c0_57] : memref<1x128xf32, #tpu.memory_space<vmem>>, vector<1x128xf32>
    %247 = vector.broadcast %246 : vector<1x128xf32> to vector<16x128xf32>
    %248 = arith.addf %245, %247 : vector<16x128xf32>
    %cst_58 = arith.constant 0.000000e+00 : f32
    %249 = vector.broadcast %cst_58 : f32 to vector<16x128xf32>
    %250 = arith.maximumf %248, %249 : vector<16x128xf32>
    %c0_59 = arith.constant 0 : index
    %c0_60 = arith.constant 0 : index
    %251 = vector.load %arg7[%c0_59, %c0_60] : memref<128x128xf32, #tpu.memory_space<vmem>>, vector<128x128xf32>
    %cst_61 = arith.constant dense<0.000000e+00> : vector<16x128xf32>
    %252 = tpu.matmul %250, %251, %cst_61 {dimension_numbers = #tpu.dot_dimension_numbers<[1], [0], [0], [1], [0, 0, 1, 1], [], []>} : vector<16x128xf32>, vector<128x128xf32>, vector<16x128xf32> -> vector<16x128xf32>
    %c0_62 = arith.constant 0 : index
    %c0_63 = arith.constant 0 : index
    %253 = vector.load %arg8[%c0_62, %c0_63] : memref<1x128xf32, #tpu.memory_space<vmem>>, vector<1x128xf32>
    %254 = vector.broadcast %253 : vector<1x128xf32> to vector<16x128xf32>
    %255 = arith.addf %252, %254 : vector<16x128xf32>
    %c0_64 = arith.constant 0 : index
    %c0_65 = arith.constant 0 : index
    %256 = vector.load %arg9[%c0_64, %c0_65] : memref<16x128xf32, #tpu.memory_space<vmem>>, vector<16x128xf32>
    tpu.vector_store %arg9[%c0_64, %c0_65], %255 {strides = array<i32>} : memref<16x128xf32, #tpu.memory_space<vmem>>, vector<16x128xf32>,
    return
  }
  func.func @transform_0(%arg0: i32) -> (i32, i32) {
    %c0_i32 = arith.constant 0 : i32
    %c0_i32_0 = arith.constant 0 : i32
    %c0_i32_1 = arith.constant 0 : i32
    return %c0_i32, %c0_i32_0 : i32, i32
  }
  func.func @transform_1(%arg0: i32) -> (i32, i32) {
    %c0_i32 = arith.constant 0 : i32
    %c0_i32_0 = arith.constant 0 : i32
    %c0_i32_1 = arith.constant 0 : i32
    return %c0_i32, %c0_i32_0 : i32, i32
  }
  func.func @transform_2(%arg0: i32) -> (i32, i32) {
    %c0_i32 = arith.constant 0 : i32
    %c0_i32_0 = arith.constant 0 : i32
    %c0_i32_1 = arith.constant 0 : i32
    return %c0_i32, %c0_i32_0 : i32, i32
  }
  func.func @transform_3(%arg0: i32) -> (i32, i32) {
    %c0_i32 = arith.constant 0 : i32
    %c0_i32_0 = arith.constant 0 : i32
    %c0_i32_1 = arith.constant 0 : i32
    return %c0_i32, %c0_i32_0 : i32, i32
  }
  func.func @transform_4(%arg0: i32) -> (i32, i32) {
    %c0_i32 = arith.constant 0 : i32
    %c0_i32_0 = arith.constant 0 : i32
    %c0_i32_1 = arith.constant 0 : i32
    return %c0_i32, %c0_i32_0 : i32, i32
  }
  func.func @transform_5(%arg0: i32) -> (i32, i32) {
    %c0_i32 = arith.constant 0 : i32
    %c0_i32_0 = arith.constant 0 : i32
    %c0_i32_1 = arith.constant 0 : i32
    return %c0_i32, %c0_i32_0 : i32, i32
  }
  func.func @transform_6(%arg0: i32) -> (i32, i32) {
    %c0_i32 = arith.constant 0 : i32
    %c0_i32_0 = arith.constant 0 : i32
    %c0_i32_1 = arith.constant 0 : i32
    return %c0_i32, %c0_i32_0 : i32, i32
  }
  func.func @transform_7(%arg0: i32) -> (i32, i32) {
    %c0_i32 = arith.constant 0 : i32
    %c0_i32_0 = arith.constant 0 : i32
    %c0_i32_1 = arith.constant 0 : i32
    return %c0_i32, %c0_i32_0 : i32, i32
  }
  func.func @transform_8(%arg0: i32) -> (i32, i32) {
    %c0_i32 = arith.constant 0 : i32
    %c0_i32_0 = arith.constant 0 : i32
    %c0_i32_1 = arith.constant 0 : i32
    return %c0_i32, %c0_i32_0 : i32, i32
  }
}

</mosaic_0001>

<llo_original>
// kernel: tpu_custom_call.1
$region0: #{tpu_custom_call.1}
  #allocation0 [shape = 'u32[]', space=smem, size = 0x4, offset = 0x4, fixed_abs, tag = 'smem constant byte address 0x4 - core index']
  #allocation1 [shape = 'u32[144,128]{1,0:T(1,128)}', space=vmem, size = 0x12000, scoped, tag = 'internal scratch']
  #allocation2 [shape = 'f32[16,128]{1,0:T(8,128)}', space=vmem, size = 0x2000, scoped, tag = 'scratch operand']
  %s0 = inlined_call_operand.hbm [shape: f32[16,27], index: 0, kind: input, shape index: {}]
  %s1 = inlined_call_operand.hbm [shape: f32[27,512], index: 1, kind: input, shape index: {}]
  %s2 = inlined_call_operand.hbm [shape: f32[128,512], index: 2, kind: input, shape index: {}]
  %s3 = inlined_call_operand.vmem [shape: f32[1,512], index: 3, kind: input, shape index: {}]
  %s4 = inlined_call_operand.hbm [shape: f32[128,128], index: 4, kind: input, shape index: {}]
  %s5 = inlined_call_operand.vmem [shape: f32[1,128], index: 5, kind: input, shape index: {}]
  %s6 = inlined_call_operand.hbm [shape: f32[128,128], index: 6, kind: input, shape index: {}]
  %s7 = inlined_call_operand.vmem [shape: f32[1,128], index: 7, kind: input, shape index: {}]
  %s8 = inlined_call_operand.hbm [shape: f32[16,128], index: 8, kind: output, shape index: {}]
  %s9 = sld [smem:[#allocation0]]
  $region62: #{tpu_custom_call.1} parent=0
    _
  %s11 = ssub.s32 1, %s9
  %s12 = scalar_select 0, %s11, %s9
  $region1: #{tpu_custom_call.1} parent=0
    #allocation3 [shape = 'u8[8192]{0}', space=vmem, size = 0x2000, scoped, tag = 'input window, operand 0, single buffered']
    #allocation4 [shape = 's32[1]{0}', space=sflag, size = 0x4, scoped, tag = 'scoped memory for tpu_custom_call.1']
    #allocation5 [shape = 's32[1]{0}', space=sflag, size = 0x4, scoped, tag = 'scoped memory for tpu_custom_call.1']
    #allocation6 [shape = 'u8[65536]{0}', space=vmem, size = 0x10000, scoped, tag = 'input window, operand 1, single buffered']
    #allocation7 [shape = 's32[1]{0}', space=sflag, size = 0x4, scoped, tag = 'scoped memory for tpu_custom_call.1']
    #allocation8 [shape = 'u8[262144]{0}', space=vmem, size = 0x40000, scoped, tag = 'input window, operand 2, single buffered']
    #allocation9 [shape = 'u8[65536]{0}', space=vmem, size = 0x10000, scoped, tag = 'input window, operand 4, single buffered']
    #allocation10 [shape = 's32[1]{0}', space=sflag, size = 0x4, scoped, tag = 'scoped memory for tpu_custom_call.1']
    #allocation11 [shape = 'u8[65536]{0}', space=vmem, size = 0x10000, scoped, tag = 'input window, operand 6, single buffered']
    #allocation12 [shape = 'u8[8192]{0}', space=vmem, size = 0x2000, scoped, tag = 'output window, operand 0, single buffered']
    %13 = vsyncpa [#allocation4], 0
    %14 = vsyncpa [#allocation7], 0
    %15 = vsyncpa [#allocation10], 0
    %16 = vsyncpa [#allocation5], 0
    // Predicated region
    $region2: #{tpu_custom_call.1} parent=1 // pred_check
      _
    $region3: #{tpu_custom_call.1} parent=1 // pred_check_branch
      %18 = sbr.rel (0) target = $region5
    $region4: #{tpu_custom_call.1} parent=1 // pred_region
      %s20 = ssub.s32 256, 256
      %21 = vsyncadd [#allocation4], %s20
      %s22 = sshll.u32 [#allocation3], 4
      %s23 = int_to_ptr.vmem [resolvable:$true] %s22
      %28 = dma.hbm_to_vmem [thread:$0]  %s0, 256, %s23, [#allocation4], 128, 128, 8
    $region5: #{tpu_custom_call.1} parent=1 // pred_fallthru
      _
    // Predicated region
    $region6: #{tpu_custom_call.1} parent=1 // pred_check
      _
    $region7: #{tpu_custom_call.1} parent=1 // pred_check_branch
      %30 = sbr.rel (0) target = $region9
    $region8: #{tpu_custom_call.1} parent=1 // pred_region
      %s32 = ssub.s32 2048, 2048
      %33 = vsyncadd [#allocation7], %s32
      %s34 = sshll.u32 [#allocation6], 4
      %s35 = int_to_ptr.vmem [resolvable:$true] %s34
      %40 = dma.hbm_to_vmem [thread:$0]  %s1, 2048, %s35, [#allocation7], 512, 512, 32
    $region9: #{tpu_custom_call.1} parent=1 // pred_fallthru
      _
    // Predicated region
    $region10: #{tpu_custom_call.1} parent=1 // pred_check
      _
    $region11: #{tpu_custom_call.1} parent=1 // pred_check_branch
      %42 = sbr.rel (0) target = $region13
    $region12: #{tpu_custom_call.1} parent=1 // pred_region
      %s44 = ssub.s32 8192, 8192
      %45 = vsyncadd [#allocation7], %s44
      %s46 = sshll.u32 [#allocation8], 4
      %s47 = int_to_ptr.vmem [resolvable:$true] %s46
      %52 = dma.hbm_to_vmem [thread:$0]  %s2, 8192, %s47, [#allocation7], 512, 512, 32
    $region13: #{tpu_custom_call.1} parent=1 // pred_fallthru
      _
    // Predicated region
    $region14: #{tpu_custom_call.1} parent=1 // pred_check
      _
    $region15: #{tpu_custom_call.1} parent=1 // pred_check_branch
      %54 = sbr.rel (0) target = $region17
    $region16: #{tpu_custom_call.1} parent=1 // pred_region
      _
    $region17: #{tpu_custom_call.1} parent=1 // pred_fallthru
      _
    // Predicated region
    $region18: #{tpu_custom_call.1} parent=1 // pred_check
      _
    $region19: #{tpu_custom_call.1} parent=1 // pred_check_branch
      %56 = sbr.rel (0) target = $region21
    $region20: #{tpu_custom_call.1} parent=1 // pred_region
      %s58 = ssub.s32 2048, 2048
      %59 = vsyncadd [#allocation10], %s58
      %s60 = sshll.u32 [#allocation9], 4
      %s61 = int_to_ptr.vmem [resolvable:$true] %s60
      %66 = dma.hbm_to_vmem [thread:$0]  %s4, 2048, %s61, [#allocation10], 128, 128, 8
    $region21: #{tpu_custom_call.1} parent=1 // pred_fallthru
      _
    // Predicated region
    $region22: #{tpu_custom_call.1} parent=1 // pred_check
      _
    $region23: #{tpu_custom_call.1} parent=1 // pred_check_branch
      %68 = sbr.rel (0) target = $region25
    $region24: #{tpu_custom_call.1} parent=1 // pred_region
      _
    $region25: #{tpu_custom_call.1} parent=1 // pred_fallthru
      _
    // Predicated region
    $region26: #{tpu_custom_call.1} parent=1 // pred_check
      _
    $region27: #{tpu_custom_call.1} parent=1 // pred_check_branch
      %70 = sbr.rel (0) target = $region29
    $region28: #{tpu_custom_call.1} parent=1 // pred_region
      %s72 = ssub.s32 2048, 2048
      %73 = vsyncadd [#allocation10], %s72
      %s74 = sshll.u32 [#allocation11], 4
      %s75 = int_to_ptr.vmem [resolvable:$true] %s74
      %80 = dma.hbm_to_vmem [thread:$0]  %s6, 2048, %s75, [#allocation10], 128, 128, 8
    $region29: #{tpu_custom_call.1} parent=1 // pred_fallthru
      _
    // Predicated region
    $region30: #{tpu_custom_call.1} parent=1 // pred_check
      _
    $region31: #{tpu_custom_call.1} parent=1 // pred_check_branch
      %82 = sbr.rel (0) target = $region33
    $region32: #{tpu_custom_call.1} parent=1 // pred_region
      _
    $region33: #{tpu_custom_call.1} parent=1 // pred_fallthru
      _
    // Predicated region
    $region34: #{tpu_custom_call.1} parent=1 // pred_check
      _
    $region35: #{tpu_custom_call.1} parent=1 // pred_check_branch
      %84 = sbr.rel (0) target = $region37
    $region36: #{tpu_custom_call.1} parent=1 // pred_region
      %85 = dma.done [#allocation4], 256
    $region37: #{tpu_custom_call.1} parent=1 // pred_fallthru
      _
    // Predicated region
    $region38: #{tpu_custom_call.1} parent=1 // pred_check
      _
    $region39: #{tpu_custom_call.1} parent=1 // pred_check_branch
      %87 = sbr.rel (0) target = $region41
    $region40: #{tpu_custom_call.1} parent=1 // pred_region
      %88 = dma.done [#allocation7], 2048
    $region41: #{tpu_custom_call.1} parent=1 // pred_fallthru
      _
    // Predicated region
    $region42: #{tpu_custom_call.1} parent=1 // pred_check
      _
    $region43: #{tpu_custom_call.1} parent=1 // pred_check_branch
      %90 = sbr.rel (0) target = $region45
    $region44: #{tpu_custom_call.1} parent=1 // pred_region
      %91 = dma.done [#allocation7], 8192
    $region45: #{tpu_custom_call.1} parent=1 // pred_fallthru
      _
    // Predicated region
    $region46: #{tpu_custom_call.1} parent=1 // pred_check
      _
    $region47: #{tpu_custom_call.1} parent=1 // pred_check_branch
      %93 = sbr.rel (0) target = $region49
    $region48: #{tpu_custom_call.1} parent=1 // pred_region
      %94 = dma.done [#allocation10], 2048
    $region49: #{tpu_custom_call.1} parent=1 // pred_fallthru
      _
    // Predicated region
    $region50: #{tpu_custom_call.1} parent=1 // pred_check
      _
    $region51: #{tpu_custom_call.1} parent=1 // pred_check_branch
      %96 = sbr.rel (0) target = $region53
    $region52: #{tpu_custom_call.1} parent=1 // pred_region
      %97 = dma.done [#allocation10], 2048
    $region53: #{tpu_custom_call.1} parent=1 // pred_fallthru
      _
    %v98 = vld [vmem:[#allocation3] sm:$0xff]
    %v99 = vld [vmem:[#allocation3 + $0x8] sm:$0xff]
    %v100 = vld [vmem:[#allocation6] sm:$0xff]
    %v101 = vld [vmem:[#allocation6 + $0x8] sm:$0xff]
    %v102 = vld [vmem:[#allocation6 + $0x10] sm:$0xff]
    %v103 = vld [vmem:[#allocation6 + $0x18] sm:$0xff]
    %v104 = vld [vmem:[#allocation6 + $0x20] sm:$0xff]
    %v105 = vld [vmem:[#allocation6 + $0x28] sm:$0xff]
    %v106 = vld [vmem:[#allocation6 + $0x30] sm:$0xff]
    %v107 = vld [vmem:[#allocation6 + $0x38] sm:$0xff]
    %v108 = vld [vmem:[#allocation6 + $0x40] sm:$0xff]
    %v109 = vld [vmem:[#allocation6 + $0x48] sm:$0xff]
    %v110 = vld [vmem:[#allocation6 + $0x50] sm:$0xff]
    %v111 = vld [vmem:[#allocation6 + $0x58] sm:$0xff]
    %v112 = vld [vmem:[#allocation6 + $0x60] sm:$0x7]
    %v113 = vld [vmem:[#allocation6 + $0x68] sm:$0x7]
    %v114 = vld [vmem:[#allocation6 + $0x70] sm:$0x7]
    %v115 = vld [vmem:[#allocation6 + $0x78] sm:$0x7]
    %v116 = vld [vmem:[%s3] sm:$0xf]
    %v118 = vlaneseq
    %v119 = vshrl.u32 %v118, 7
    %v120 = vsub.s32 0, %v119
    %v121 = vrot.slane %v116, %v120
    %v122 = vlaneseq
    %v123 = vshrl.u32 %v122, 7
    %v124 = vsub.s32 1, %v123
    %v125 = vrot.slane %v116, %v124
    %v126 = vlaneseq
    %v127 = vshrl.u32 %v126, 7
    %v128 = vsub.s32 2, %v127
    %v129 = vrot.slane %v116, %v128
    %v130 = vlaneseq
    %v131 = vshrl.u32 %v130, 7
    %v132 = vsub.s32 3, %v131
    %v133 = vrot.slane %v116, %v132
    %vm138 = vcmask 220160
    %v140 = vsel %vm138, %v98, 0
    %v143 = vsel %vm138, %v99, 0
    %vm145 = vcmask 1042432
    %v147 = vsel %vm145, %v112, 0
    %v150 = vsel %vm145, %v113, 0
    %v153 = vsel %vm145, %v114, 0
    %v156 = vsel %vm145, %v115, 0
    %158 = vmatprep.subr.mxu0 0.0
    %159 = vmatpush1.msra.mxu0 0.0
    %160 = vmatprep.subr.mxu0 0.0
    %161 = vmatpush1.msra.mxu0 0.0
    %162 = vmatprep.subr.mxu0 0.0
    %163 = vmatpush1.msra.mxu0 0.0
    %164 = vmatprep.subr.mxu0 0.0
    %165 = vmatpush1.msra.mxu0 0.0
    %166 = vmatprep.subr.mxu0 0.0
    %167 = vmatpush1.msra.mxu0 0.0
    %168 = vmatprep.subr.mxu0 0.0
    %169 = vmatpush1.msra.mxu0 0.0
    %170 = vmatprep.subr.mxu0 0.0
    %171 = vmatpush1.msra.mxu0 0.0
    %172 = vmatprep.subr.mxu0 0.0
    %173 = vmatpush1.msra.mxu0 0.0
    %174 = vmatprep.subr.mxu0 0.0
    %175 = vmatpush1.msra.mxu0 0.0
    %176 = vmatprep.subr.mxu0 0.0
    %177 = vmatpush1.msra.mxu0 0.0
    %178 = vmatprep.subr.mxu0 0.0
    %179 = vmatpush1.msra.mxu0 0.0
    %180 = vmatprep.subr.mxu0 0.0
    %181 = vmatpush1.msra.mxu0 0.0
    %182 = vmatprep.subr.mxu0 %v150
    %183 = vmatpush1.msra.mxu0 %v147
    %184 = vmatprep.subr.mxu0 %v109
    %185 = vmatpush1.msra.mxu0 %v108
    %186 = vmatprep.subr.mxu0 %v105
    %187 = vmatpush1.msra.mxu0 %v104
    %188 = vmatprep.subr.mxu0 %v101
    %189 = vmatpush1.msra.mxu0 %v100
    %190 = vmatprep.subr.mxu0 0.0
    %191 = vmatpush2.msra.mxu0 0.0
    %192 = vmatprep.subr.mxu0 0.0
    %193 = vmatpush2.msra.mxu0 0.0
    %194 = vmatprep.subr.mxu0 0.0
    %195 = vmatpush2.msra.mxu0 0.0
    %196 = vmatprep.subr.mxu0 0.0
    %197 = vmatpush2.msra.mxu0 0.0
    %198 = vmatprep.subr.mxu0 0.0
    %199 = vmatpush2.msra.mxu0 0.0
    %200 = vmatprep.subr.mxu0 0.0
    %201 = vmatpush2.msra.mxu0 0.0
    %202 = vmatprep.subr.mxu0 0.0
    %203 = vmatpush2.msra.mxu0 0.0
    %204 = vmatprep.subr.mxu0 0.0
    %205 = vmatpush2.msra.mxu0 0.0
    %206 = vmatprep.subr.mxu0 0.0
    %207 = vmatpush2.msra.mxu0 0.0
    %208 = vmatprep.subr.mxu0 0.0
    %209 = vmatpush2.msra.mxu0 0.0
    %210 = vmatprep.subr.mxu0 0.0
    %211 = vmatpush2.msra.mxu0 0.0
    %212 = vmatprep.subr.mxu0 0.0
    %213 = vmatpush2.msra.mxu0 0.0
    %214 = vmatprep.subr.mxu0 0.0
    %215 = vmatpush2.msra.mxu0 0.0
    %216 = vmatprep.subr.mxu0 0.0
    %217 = vmatpush2.msra.mxu0 0.0
    %218 = vmatprep.subr.mxu0 0.0
    %219 = vmatpush2.msra.mxu0 0.0
    %220 = vmatprep.subr.mxu0 0.0
    %221 = vmatpush2.msra.mxu0 0.0
    %222 = vmatprep.mubr.f32.mxu0 0.0
    %223 = vmatmul.mubr.f32.gmra.mxu0 %v140
    %v224 = vpop.f32.mrf.mxu0
    %v225 = vadd.f32 %v121, %v224
    %v226 = vpop.f32.mrf.mxu0
    %v227 = vadd.f32 %v125, %v226
    %228 = vmatprep.mubr.f32.mxu0 0.0
    %229 = vmatmul.mubr.f32.gmra.mxu0 %v143
    %v230 = vpop.f32.mrf.mxu0
    %v231 = vadd.f32 %v121, %v230
    %v232 = vpop.f32.mrf.mxu0
    %v233 = vadd.f32 %v125, %v232
    %234 = vdwg.mxu0
    %235 = vmatprep.subr.mxu0 0.0
    %236 = vmatpush1.msra.mxu0 0.0
    %237 = vmatprep.subr.mxu0 0.0
    %238 = vmatpush1.msra.mxu0 0.0
    %239 = vmatprep.subr.mxu0 0.0
    %240 = vmatpush1.msra.mxu0 0.0
    %241 = vmatprep.subr.mxu0 0.0
    %242 = vmatpush1.msra.mxu0 0.0
    %243 = vmatprep.subr.mxu0 0.0
    %244 = vmatpush1.msra.mxu0 0.0
    %245 = vmatprep.subr.mxu0 0.0
    %246 = vmatpush1.msra.mxu0 0.0
    %247 = vmatprep.subr.mxu0 0.0
    %248 = vmatpush1.msra.mxu0 0.0
    %249 = vmatprep.subr.mxu0 0.0
    %250 = vmatpush1.msra.mxu0 0.0
    %251 = vmatprep.subr.mxu0 0.0
    %252 = vmatpush1.msra.mxu0 0.0
    %253 = vmatprep.subr.mxu0 0.0
    %254 = vmatpush1.msra.mxu0 0.0
    %255 = vmatprep.subr.mxu0 0.0
    %256 = vmatpush1.msra.mxu0 0.0
    %257 = vmatprep.subr.mxu0 0.0
    %258 = vmatpush1.msra.mxu0 0.0
    %259 = vmatprep.subr.mxu0 %v156
    %260 = vmatpush1.msra.mxu0 %v153
    %261 = vmatprep.subr.mxu0 %v111
    %262 = vmatpush1.msra.mxu0 %v110
    %263 = vmatprep.subr.mxu0 %v107
    %264 = vmatpush1.msra.mxu0 %v106
    %265 = vmatprep.subr.mxu0 %v103
    %266 = vmatpush1.msra.mxu0 %v102
    %267 = vmatprep.subr.mxu0 0.0
    %268 = vmatpush2.msra.mxu0 0.0
    %269 = vmatprep.subr.mxu0 0.0
    %270 = vmatpush2.msra.mxu0 0.0
    %271 = vmatprep.subr.mxu0 0.0
    %272 = vmatpush2.msra.mxu0 0.0
    %273 = vmatprep.subr.mxu0 0.0
    %274 = vmatpush2.msra.mxu0 0.0
    %275 = vmatprep.subr.mxu0 0.0
    %276 = vmatpush2.msra.mxu0 0.0
    %277 = vmatprep.subr.mxu0 0.0
    %278 = vmatpush2.msra.mxu0 0.0
    %279 = vmatprep.subr.mxu0 0.0
    %280 = vmatpush2.msra.mxu0 0.0
    %281 = vmatprep.subr.mxu0 0.0
    %282 = vmatpush2.msra.mxu0 0.0
    %283 = vmatprep.subr.mxu0 0.0
    %284 = vmatpush2.msra.mxu0 0.0
    %285 = vmatprep.subr.mxu0 0.0
    %286 = vmatpush2.msra.mxu0 0.0
    %287 = vmatprep.subr.mxu0 0.0
    %288 = vmatpush2.msra.mxu0 0.0
    %289 = vmatprep.subr.mxu0 0.0
    %290 = vmatpush2.msra.mxu0 0.0
    %291 = vmatprep.subr.mxu0 0.0
    %292 = vmatpush2.msra.mxu0 0.0
    %293 = vmatprep.subr.mxu0 0.0
    %294 = vmatpush2.msra.mxu0 0.0
    %295 = vmatprep.subr.mxu0 0.0
    %296 = vmatpush2.msra.mxu0 0.0
    %297 = vmatprep.subr.mxu0 0.0
    %298 = vmatpush2.msra.mxu0 0.0
    %299 = vmatprep.mubr.f32.mxu0 0.0
    %300 = vmatmul.mubr.f32.gmra.mxu0 %v140
    %v301 = vpop.f32.mrf.mxu0
    %v302 = vadd.f32 %v129, %v301
    %v303 = vpop.f32.mrf.mxu0
    %v304 = vadd.f32 %v133, %v303
    %305 = vmatprep.mubr.f32.mxu0 0.0
    %306 = vmatmul.mubr.f32.gmra.mxu0 %v143
    %v307 = vpop.f32.mrf.mxu0
    %v308 = vadd.f32 %v129, %v307
    %v309 = vpop.f32.mrf.mxu0
    %v310 = vadd.f32 %v133, %v309
    %311 = vdwg.mxu0
    %v312 = vld [vmem:[#allocation8] sm:$0xff]
    %v313 = vld [vmem:[#allocation8 + $0x8] sm:$0xff]
    %v314 = vld [vmem:[#allocation8 + $0x10] sm:$0xff]
    %v315 = vld [vmem:[#allocation8 + $0x18] sm:$0xff]
    %v316 = vld [vmem:[#allocation8 + $0x20] sm:$0xff]
    %v317 = vld [vmem:[#allocation8 + $0x28] sm:$0xff]
    %v318 = vld [vmem:[#allocation8 + $0x30] sm:$0xff]
    %v319 = vld [vmem:[#allocation8 + $0x38] sm:$0xff]
    %v320 = vld [vmem:[#allocation8 + $0x40] sm:$0xff]
    %v321 = vld [vmem:[#allocation8 + $0x48] sm:$0xff]
    %v322 = vld [vmem:[#allocation8 + $0x50] sm:$0xff]
    %v323 = vld [vmem:[#allocation8 + $0x58] sm:$0xff]
    %v324 = vld [vmem:[#allocation8 + $0x60] sm:$0xff]
    %v325 = vld [vmem:[#allocation8 + $0x68] sm:$0xff]
    %v326 = vld [vmem:[#allocation8 + $0x70] sm:$0xff]
    %v327 = vld [vmem:[#allocation8 + $0x78] sm:$0xff]
    %v328 = vld [vmem:[#allocation8 + $0x80] sm:$0xff]
    %v329 = vld [vmem:[#allocation8 + $0x88] sm:$0xff]
    %v330 = vld [vmem:[#allocation8 + $0x90] sm:$0xff]
    %v331 = vld [vmem:[#allocation8 + $0x98] sm:$0xff]
    %v332 = vld [vmem:[#allocation8 + $0xa0] sm:$0xff]
    %v333 = vld [vmem:[#allocation8 + $0xa8] sm:$0xff]
    %v334 = vld [vmem:[#allocation8 + $0xb0] sm:$0xff]
    %v335 = vld [vmem:[#allocation8 + $0xb8] sm:$0xff]
    %v336 = vld [vmem:[#allocation8 + $0xc0] sm:$0xff]
    %v337 = vld [vmem:[#allocation8 + $0xc8] sm:$0xff]
    %v338 = vld [vmem:[#allocation8 + $0xd0] sm:$0xff]
    %v339 = vld [vmem:[#allocation8 + $0xd8] sm:$0xff]
    %v340 = vld [vmem:[#allocation8 + $0xe0] sm:$0xff]
    %v341 = vld [vmem:[#allocation8 + $0xe8] sm:$0xff]
    %v342 = vld [vmem:[#allocation8 + $0xf0] sm:$0xff]
    %v343 = vld [vmem:[#allocation8 + $0xf8] sm:$0xff]
    %v344 = vld [vmem:[#allocation8 + $0x100] sm:$0xff]
    %v345 = vld [vmem:[#allocation8 + $0x108] sm:$0xff]
    %v346 = vld [vmem:[#allocation8 + $0x110] sm:$0xff]
    %v347 = vld [vmem:[#allocation8 + $0x118] sm:$0xff]
    %v348 = vld [vmem:[#allocation8 + $0x120] sm:$0xff]
    %v349 = vld [vmem:[#allocation8 + $0x128] sm:$0xff]
    %v350 = vld [vmem:[#allocation8 + $0x130] sm:$0xff]
    %v351 = vld [vmem:[#allocation8 + $0x138] sm:$0xff]
    %v352 = vld [vmem:[#allocation8 + $0x140] sm:$0xff]
    %v353 = vld [vmem:[#allocation8 + $0x148] sm:$0xff]
    %v354 = vld [vmem:[#allocation8 + $0x150] sm:$0xff]
    %v355 = vld [vmem:[#allocation8 + $0x158] sm:$0xff]
    %v356 = vld [vmem:[#allocation8 + $0x160] sm:$0xff]
    %v357 = vld [vmem:[#allocation8 + $0x168] sm:$0xff]
    %v358 = vld [vmem:[#allocation8 + $0x170] sm:$0xff]
    %v359 = vld [vmem:[#allocation8 + $0x178] sm:$0xff]
    %v360 = vld [vmem:[#allocation8 + $0x180] sm:$0xff]
    %v361 = vld [vmem:[#allocation8 + $0x188] sm:$0xff]
    %v362 = vld [vmem:[#allocation8 + $0x190] sm:$0xff]
    %v363 = vld [vmem:[#allocation8 + $0x198] sm:$0xff]
    %v364 = vld [vmem:[#allocation8 + $0x1a0] sm:$0xff]
    %v365 = vld [vmem:[#allocation8 + $0x1a8] sm:$0xff]
    %v366 = vld [vmem:[#allocation8 + $0x1b0] sm:$0xff]
    %v367 = vld [vmem:[#allocation8 + $0x1b8] sm:$0xff]
    %v368 = vld [vmem:[#allocation8 + $0x1c0] sm:$0xff]
    %v369 = vld [vmem:[#allocation8 + $0x1c8] sm:$0xff]
    %v370 = vld [vmem:[#allocation8 + $0x1d0] sm:$0xff]
    %v371 = vld [vmem:[#allocation8 + $0x1d8] sm:$0xff]
    %v372 = vld [vmem:[#allocation8 + $0x1e0] sm:$0xff]
    %v373 = vld [vmem:[#allocation8 + $0x1e8] sm:$0xff]
    %v374 = vld [vmem:[#allocation8 + $0x1f0] sm:$0xff]
    %v375 = vld [vmem:[#allocation8 + $0x1f8] sm:$0xff]
    %376 = vmatprep.subr.mxu0 %v373
    %377 = vmatpush1.msra.mxu0 %v372
    %378 = vmatprep.subr.mxu0 %v369
    %379 = vmatpush1.msra.mxu0 %v368
    %380 = vmatprep.subr.mxu0 %v365
    %381 = vmatpush1.msra.mxu0 %v364
    %382 = vmatprep.subr.mxu0 %v361
    %383 = vmatpush1.msra.mxu0 %v360
    %384 = vmatprep.subr.mxu0 %v357
    %385 = vmatpush1.msra.mxu0 %v356
    %386 = vmatprep.subr.mxu0 %v353
    %387 = vmatpush1.msra.mxu0 %v352
    %388 = vmatprep.subr.mxu0 %v349
    %389 = vmatpush1.msra.mxu0 %v348
    %390 = vmatprep.subr.mxu0 %v345
    %391 = vmatpush1.msra.mxu0 %v344
    %392 = vmatprep.subr.mxu0 %v341
    %393 = vmatpush1.msra.mxu0 %v340
    %394 = vmatprep.subr.mxu0 %v337
    %395 = vmatpush1.msra.mxu0 %v336
    %396 = vmatprep.subr.mxu0 %v333
    %397 = vmatpush1.msra.mxu0 %v332
    %398 = vmatprep.subr.mxu0 %v329
    %399 = vmatpush1.msra.mxu0 %v328
    %400 = vmatprep.subr.mxu0 %v325
    %401 = vmatpush1.msra.mxu0 %v324
    %402 = vmatprep.subr.mxu0 %v321
    %403 = vmatpush1.msra.mxu0 %v320
    %404 = vmatprep.subr.mxu0 %v317
    %405 = vmatpush1.msra.mxu0 %v316
    %406 = vmatprep.subr.mxu0 %v313
    %407 = vmatpush1.msra.mxu0 %v312
    %408 = vmatprep.subr.mxu0 0.0
    %409 = vmatpush2.msra.mxu0 0.0
    %410 = vmatprep.subr.mxu0 0.0
    %411 = vmatpush2.msra.mxu0 0.0
    %412 = vmatprep.subr.mxu0 0.0
    %413 = vmatpush2.msra.mxu0 0.0
    %414 = vmatprep.subr.mxu0 0.0
    %415 = vmatpush2.msra.mxu0 0.0
    %416 = vmatprep.subr.mxu0 0.0
    %417 = vmatpush2.msra.mxu0 0.0
    %418 = vmatprep.subr.mxu0 0.0
    %419 = vmatpush2.msra.mxu0 0.0
    %420 = vmatprep.subr.mxu0 0.0
    %421 = vmatpush2.msra.mxu0 0.0
    %422 = vmatprep.subr.mxu0 0.0
    %423 = vmatpush2.msra.mxu0 0.0
    %424 = vmatprep.subr.mxu0 0.0
    %425 = vmatpush2.msra.mxu0 0.0
    %426 = vmatprep.subr.mxu0 0.0
    %427 = vmatpush2.msra.mxu0 0.0
    %428 = vmatprep.subr.mxu0 0.0
    %429 = vmatpush2.msra.mxu0 0.0
    %430 = vmatprep.subr.mxu0 0.0
    %431 = vmatpush2.msra.mxu0 0.0
    %432 = vmatprep.subr.mxu0 0.0
    %433 = vmatpush2.msra.mxu0 0.0
    %434 = vmatprep.subr.mxu0 0.0
    %435 = vmatpush2.msra.mxu0 0.0
    %436 = vmatprep.subr.mxu0 0.0
    %437 = vmatpush2.msra.mxu0 0.0
    %438 = vmatprep.subr.mxu0 0.0
    %439 = vmatpush2.msra.mxu0 0.0
    %440 = vmatprep.mubr.f32.mxu0 0.0
    %441 = vmatmul.mubr.f32.gmra.mxu0 0.0
    %v442 = vpop.f32.mrf.mxu0
    %v443 = vadd.f32 0.0, %v442
    %v444 = vpop.f32.mrf.mxu0
    %v445 = vadd.f32 0.0, %v444
    %446 = vdwg.mxu0
    %447 = vmatprep.subr.mxu0 %v375
    %448 = vmatpush1.msra.mxu0 %v374
    %449 = vmatprep.subr.mxu0 %v371
    %450 = vmatpush1.msra.mxu0 %v370
    %451 = vmatprep.subr.mxu0 %v367
    %452 = vmatpush1.msra.mxu0 %v366
    %453 = vmatprep.subr.mxu0 %v363
    %454 = vmatpush1.msra.mxu0 %v362
    %455 = vmatprep.subr.mxu0 %v359
    %456 = vmatpush1.msra.mxu0 %v358
    %457 = vmatprep.subr.mxu0 %v355
    %458 = vmatpush1.msra.mxu0 %v354
    %459 = vmatprep.subr.mxu0 %v351
    %460 = vmatpush1.msra.mxu0 %v350
    %461 = vmatprep.subr.mxu0 %v347
    %462 = vmatpush1.msra.mxu0 %v346
    %463 = vmatprep.subr.mxu0 %v343
    %464 = vmatpush1.msra.mxu0 %v342
    %465 = vmatprep.subr.mxu0 %v339
    %466 = vmatpush1.msra.mxu0 %v338
    %467 = vmatprep.subr.mxu0 %v335
    %468 = vmatpush1.msra.mxu0 %v334
    %469 = vmatprep.subr.mxu0 %v331
    %470 = vmatpush1.msra.mxu0 %v330
    %471 = vmatprep.subr.mxu0 %v327
    %472 = vmatpush1.msra.mxu0 %v326
    %473 = vmatprep.subr.mxu0 %v323
    %474 = vmatpush1.msra.mxu0 %v322
    %475 = vmatprep.subr.mxu0 %v319
    %476 = vmatpush1.msra.mxu0 %v318
    %477 = vmatprep.subr.mxu0 %v315
    %478 = vmatpush1.msra.mxu0 %v314
    %479 = vmatprep.subr.mxu0 0.0
    %480 = vmatpush2.msra.mxu0 0.0
    %481 = vmatprep.subr.mxu0 0.0
    %482 = vmatpush2.msra.mxu0 0.0
    %483 = vmatprep.subr.mxu0 0.0
    %484 = vmatpush2.msra.mxu0 0.0
    %485 = vmatprep.subr.mxu0 0.0
    %486 = vmatpush2.msra.mxu0 0.0
    %487 = vmatprep.subr.mxu0 0.0
    %488 = vmatpush2.msra.mxu0 0.0
    %489 = vmatprep.subr.mxu0 0.0
    %490 = vmatpush2.msra.mxu0 0.0
    %491 = vmatprep.subr.mxu0 0.0
    %492 = vmatpush2.msra.mxu0 0.0
    %493 = vmatprep.subr.mxu0 0.0
    %494 = vmatpush2.msra.mxu0 0.0
    %495 = vmatprep.subr.mxu0 0.0
    %496 = vmatpush2.msra.mxu0 0.0
    %497 = vmatprep.subr.mxu0 0.0
    %498 = vmatpush2.msra.mxu0 0.0
    %499 = vmatprep.subr.mxu0 0.0
    %500 = vmatpush2.msra.mxu0 0.0
    %501 = vmatprep.subr.mxu0 0.0
    %502 = vmatpush2.msra.mxu0 0.0
    %503 = vmatprep.subr.mxu0 0.0
    %504 = vmatpush2.msra.mxu0 0.0
    %505 = vmatprep.subr.mxu0 0.0
    %506 = vmatpush2.msra.mxu0 0.0
    %507 = vmatprep.subr.mxu0 0.0
    %508 = vmatpush2.msra.mxu0 0.0
    %509 = vmatprep.subr.mxu0 0.0
    %510 = vmatpush2.msra.mxu0 0.0
    %511 = vmatprep.mubr.f32.mxu0 0.0
    %512 = vmatmul.mubr.f32.gmra.mxu0 0.0
    %v513 = vpop.f32.mrf.mxu0
    %v514 = vadd.f32 0.0, %v513
    %v515 = vpop.f32.mrf.mxu0
    %v516 = vadd.f32 0.0, %v515
    %517 = vdwg.mxu0
    %v518 = vadd.f32 %v225, %v443
    %v519 = vadd.f32 %v227, %v445
    %v520 = vadd.f32 %v302, %v514
    %v521 = vadd.f32 %v304, %v516
    %v522 = vxor.u32 %v518, 2147483648
    %v523 = vmul.f32 %v522, 1.442695
    %v524 = vpow.pop %v523
    %v525 = vadd.f32 %v524, 1.0
    %v526 = vrcp.pop %v525
    %v527 = vmul.f32 1.0, %v526
    %v528 = vxor.u32 %v519, 2147483648
    %v529 = vmul.f32 %v528, 1.442695
    %v530 = vpow.pop %v529
    %v531 = vadd.f32 %v530, 1.0
    %v532 = vrcp.pop %v531
    %v533 = vmul.f32 1.0, %v532
    %v534 = vtanh.pop %v520
    %v535 = vxor.u32 %v521, 2147483648
    %v536 = vmul.f32 %v535, 1.442695
    %v537 = vpow.pop %v536
    %v538 = vadd.f32 %v537, 1.0
    %v539 = vrcp.pop %v538
    %v540 = vmul.f32 1.0, %v539
    %v541 = vmul.f32 %v533, 0.0
    %v542 = vmul.f32 %v527, %v534
    %v543 = vadd.f32 %v541, %v542
    %v544 = vtanh.pop %v543
    %v545 = vmul.f32 %v540, %v544
    %546 = vst [vmem:[#allocation2] sm:$0x3] %v545
    %547 = vmatprep.subr.mxu0 %v373
    %548 = vmatpush1.msra.mxu0 %v372
    %549 = vmatprep.subr.mxu0 %v369
    %550 = vmatpush1.msra.mxu0 %v368
    %551 = vmatprep.subr.mxu0 %v365
    %552 = vmatpush1.msra.mxu0 %v364
    %553 = vmatprep.subr.mxu0 %v361
    %554 = vmatpush1.msra.mxu0 %v360
    %555 = vmatprep.subr.mxu0 %v357
    %556 = vmatpush1.msra.mxu0 %v356
    %557 = vmatprep.subr.mxu0 %v353
    %558 = vmatpush1.msra.mxu0 %v352
    %559 = vmatprep.subr.mxu0 %v349
    %560 = vmatpush1.msra.mxu0 %v348
    %561 = vmatprep.subr.mxu0 %v345
    %562 = vmatpush1.msra.mxu0 %v344
    %563 = vmatprep.subr.mxu0 %v341
    %564 = vmatpush1.msra.mxu0 %v340
    %565 = vmatprep.subr.mxu0 %v337
    %566 = vmatpush1.msra.mxu0 %v336
    %567 = vmatprep.subr.mxu0 %v333
    %568 = vmatpush1.msra.mxu0 %v332
    %569 = vmatprep.subr.mxu0 %v329
    %570 = vmatpush1.msra.mxu0 %v328
    %571 = vmatprep.subr.mxu0 %v325
    %572 = vmatpush1.msra.mxu0 %v324
    %573 = vmatprep.subr.mxu0 %v321
    %574 = vmatpush1.msra.mxu0 %v320
    %575 = vmatprep.subr.mxu0 %v317
    %576 = vmatpush1.msra.mxu0 %v316
    %577 = vmatprep.subr.mxu0 %v313
    %578 = vmatpush1.msra.mxu0 %v312
    %579 = vmatprep.subr.mxu0 0.0
    %580 = vmatpush2.msra.mxu0 0.0
    %581 = vmatprep.subr.mxu0 0.0
    %582 = vmatpush2.msra.mxu0 0.0
    %583 = vmatprep.subr.mxu0 0.0
    %584 = vmatpush2.msra.mxu0 0.0
    %585 = vmatprep.subr.mxu0 0.0
    %586 = vmatpush2.msra.mxu0 0.0
    %587 = vmatprep.subr.mxu0 0.0
    %588 = vmatpush2.msra.mxu0 0.0
    %589 = vmatprep.subr.mxu0 0.0
    %590 = vmatpush2.msra.mxu0 0.0
    %591 = vmatprep.subr.mxu0 0.0
    %592 = vmatpush2.msra.mxu0 0.0
    %593 = vmatprep.subr.mxu0 0.0
    %594 = vmatpush2.msra.mxu0 0.0
    %595 = vmatprep.subr.mxu0 0.0
    %596 = vmatpush2.msra.mxu0 0.0
    %597 = vmatprep.subr.mxu0 0.0
    %598 = vmatpush2.msra.mxu0 0.0
    %599 = vmatprep.subr.mxu0 0.0
    %600 = vmatpush2.msra.mxu0 0.0
    %601 = vmatprep.subr.mxu0 0.0
    %602 = vmatpush2.msra.mxu0 0.0
    %603 = vmatprep.subr.mxu0 0.0
    %604 = vmatpush2.msra.mxu0 0.0
    %605 = vmatprep.subr.mxu0 0.0
    %606 = vmatpush2.msra.mxu0 0.0
    %607 = vmatprep.subr.mxu0 0.0
    %608 = vmatpush2.msra.mxu0 0.0
    %609 = vmatprep.subr.mxu0 0.0
    %610 = vmatpush2.msra.mxu0 0.0
    %611 = vmatprep.mubr.f32.mxu0 0.0
    %612 = vmatmul.mubr.f32.gmra.mxu0 %v545
    %v613 = vpop.f32.mrf.mxu0
    %v614 = vadd.f32 0.0, %v613
    %v615 = vpop.f32.mrf.mxu0
    %v616 = vadd.f32 0.0, %v615
    %617 = vdwg.mxu0
    %618 = vmatprep.subr.mxu0 %v375
    %619 = vmatpush1.msra.mxu0 %v374
    %620 = vmatprep.subr.mxu0 %v371
    %621 = vmatpush1.msra.mxu0 %v370
    %622 = vmatprep.subr.mxu0 %v367
    %623 = vmatpush1.msra.mxu0 %v366
    %624 = vmatprep.subr.mxu0 %v363
    %625 = vmatpush1.msra.mxu0 %v362
    %626 = vmatprep.subr.mxu0 %v359
    %627 = vmatpush1.msra.mxu0 %v358
    %628 = vmatprep.subr.mxu0 %v355
    %629 = vmatpush1.msra.mxu0 %v354
    %630 = vmatprep.subr.mxu0 %v351
    %631 = vmatpush1.msra.mxu0 %v350
    %632 = vmatprep.subr.mxu0 %v347
    %633 = vmatpush1.msra.mxu0 %v346
    %634 = vmatprep.subr.mxu0 %v343
    %635 = vmatpush1.msra.mxu0 %v342
    %636 = vmatprep.subr.mxu0 %v339
    %637 = vmatpush1.msra.mxu0 %v338
    %638 = vmatprep.subr.mxu0 %v335
    %639 = vmatpush1.msra.mxu0 %v334
    %640 = vmatprep.subr.mxu0 %v331
    %641 = vmatpush1.msra.mxu0 %v330
    %642 = vmatprep.subr.mxu0 %v327
    %643 = vmatpush1.msra.mxu0 %v326
    %644 = vmatprep.subr.mxu0 %v323
    %645 = vmatpush1.msra.mxu0 %v322
    %646 = vmatprep.subr.mxu0 %v319
    %647 = vmatpush1.msra.mxu0 %v318
    %648 = vmatprep.subr.mxu0 %v315
    %649 = vmatpush1.msra.mxu0 %v314
    %650 = vmatprep.subr.mxu0 0.0
    %651 = vmatpush2.msra.mxu0 0.0
    %652 = vmatprep.subr.mxu0 0.0
    %653 = vmatpush2.msra.mxu0 0.0
    %654 = vmatprep.subr.mxu0 0.0
    %655 = vmatpush2.msra.mxu0 0.0
    %656 = vmatprep.subr.mxu0 0.0
    %657 = vmatpush2.msra.mxu0 0.0
    %658 = vmatprep.subr.mxu0 0.0
    %659 = vmatpush2.msra.mxu0 0.0
    %660 = vmatprep.subr.mxu0 0.0
    %661 = vmatpush2.msra.mxu0 0.0
    %662 = vmatprep.subr.mxu0 0.0
    %663 = vmatpush2.msra.mxu0 0.0
    %664 = vmatprep.subr.mxu0 0.0
    %665 = vmatpush2.msra.mxu0 0.0
    %666 = vmatprep.subr.mxu0 0.0
    %667 = vmatpush2.msra.mxu0 0.0
    %668 = vmatprep.subr.mxu0 0.0
    %669 = vmatpush2.msra.mxu0 0.0
    %670 = vmatprep.subr.mxu0 0.0
    %671 = vmatpush2.msra.mxu0 0.0
    %672 = vmatprep.subr.mxu0 0.0
    %673 = vmatpush2.msra.mxu0 0.0
    %674 = vmatprep.subr.mxu0 0.0
    %675 = vmatpush2.msra.mxu0 0.0
    %676 = vmatprep.subr.mxu0 0.0
    %677 = vmatpush2.msra.mxu0 0.0
    %678 = vmatprep.subr.mxu0 0.0
    %679 = vmatpush2.msra.mxu0 0.0
    %680 = vmatprep.subr.mxu0 0.0
    %681 = vmatpush2.msra.mxu0 0.0
    %682 = vmatprep.mubr.f32.mxu0 0.0
    %683 = vmatmul.mubr.f32.gmra.mxu0 %v545
    %v684 = vpop.f32.mrf.mxu0
    %v685 = vadd.f32 0.0, %v684
    %v686 = vpop.f32.mrf.mxu0
    %v687 = vadd.f32 0.0, %v686
    %688 = vdwg.mxu0
    %v693 = vrot.slane %v614, 6
    %v694 = vrot.slane %v616, 6
    %v695 = vrot.slane %v685, 6
    %v696 = vrot.slane %v687, 6
    %v701 = vadd.f32 %v225, %v693
    %v702 = vadd.f32 %v227, %v694
    %v703 = vadd.f32 %v302, %v695
    %v704 = vadd.f32 %v304, %v696
    %v705 = vxor.u32 %v701, 2147483648
    %v706 = vmul.f32 %v705, 1.442695
    %v707 = vpow.pop %v706
    %v708 = vadd.f32 %v707, 1.0
    %v709 = vrcp.pop %v708
    %v710 = vmul.f32 1.0, %v709
    %v711 = vxor.u32 %v702, 2147483648
    %v712 = vmul.f32 %v711, 1.442695
    %v713 = vpow.pop %v712
    %v714 = vadd.f32 %v713, 1.0
    %v715 = vrcp.pop %v714
    %v716 = vmul.f32 1.0, %v715
    %v717 = vtanh.pop %v703
    %v718 = vxor.u32 %v704, 2147483648
    %v719 = vmul.f32 %v718, 1.442695
    %v720 = vpow.pop %v719
    %v721 = vadd.f32 %v720, 1.0
    %v722 = vrcp.pop %v721
    %v723 = vmul.f32 1.0, %v722
    %v725 = vrot.slane %v543, 6
    %v727 = vmul.f32 %v716, %v725
    %v728 = vmul.f32 %v710, %v717
    %v729 = vadd.f32 %v727, %v728
    %v730 = vtanh.pop %v729
    %v731 = vmul.f32 %v723, %v730
    %732 = vst [vmem:[#allocation2] sm:$0xc] %v731
    %v734 = vrot.slane %v731, 2
    %736 = vmatprep.subr.mxu0 %v373
    %737 = vmatpush1.msra.mxu0 %v372
    %738 = vmatprep.subr.mxu0 %v369
    %739 = vmatpush1.msra.mxu0 %v368
    %740 = vmatprep.subr.mxu0 %v365
    %741 = vmatpush1.msra.mxu0 %v364
    %742 = vmatprep.subr.mxu0 %v361
    %743 = vmatpush1.msra.mxu0 %v360
    %744 = vmatprep.subr.mxu0 %v357
    %745 = vmatpush1.msra.mxu0 %v356
    %746 = vmatprep.subr.mxu0 %v353
    %747 = vmatpush1.msra.mxu0 %v352
    %748 = vmatprep.subr.mxu0 %v349
    %749 = vmatpush1.msra.mxu0 %v348
    %750 = vmatprep.subr.mxu0 %v345
    %751 = vmatpush1.msra.mxu0 %v344
    %752 = vmatprep.subr.mxu0 %v341
    %753 = vmatpush1.msra.mxu0 %v340
    %754 = vmatprep.subr.mxu0 %v337
    %755 = vmatpush1.msra.mxu0 %v336
    %756 = vmatprep.subr.mxu0 %v333
    %757 = vmatpush1.msra.mxu0 %v332
    %758 = vmatprep.subr.mxu0 %v329
    %759 = vmatpush1.msra.mxu0 %v328
    %760 = vmatprep.subr.mxu0 %v325
    %761 = vmatpush1.msra.mxu0 %v324
    %762 = vmatprep.subr.mxu0 %v321
    %763 = vmatpush1.msra.mxu0 %v320
    %764 = vmatprep.subr.mxu0 %v317
    %765 = vmatpush1.msra.mxu0 %v316
    %766 = vmatprep.subr.mxu0 %v313
    %767 = vmatpush1.msra.mxu0 %v312
    %768 = vmatprep.subr.mxu0 0.0
    %769 = vmatpush2.msra.mxu0 0.0
    %770 = vmatprep.subr.mxu0 0.0
    %771 = vmatpush2.msra.mxu0 0.0
    %772 = vmatprep.subr.mxu0 0.0
    %773 = vmatpush2.msra.mxu0 0.0
    %774 = vmatprep.subr.mxu0 0.0
    %775 = vmatpush2.msra.mxu0 0.0
    %776 = vmatprep.subr.mxu0 0.0
    %777 = vmatpush2.msra.mxu0 0.0
    %778 = vmatprep.subr.mxu0 0.0
    %779 = vmatpush2.msra.mxu0 0.0
    %780 = vmatprep.subr.mxu0 0.0
    %781 = vmatpush2.msra.mxu0 0.0
    %782 = vmatprep.subr.mxu0 0.0
    %783 = vmatpush2.msra.mxu0 0.0
    %784 = vmatprep.subr.mxu0 0.0
    %785 = vmatpush2.msra.mxu0 0.0
    %786 = vmatprep.subr.mxu0 0.0
    %787 = vmatpush2.msra.mxu0 0.0
    %788 = vmatprep.subr.mxu0 0.0
    %789 = vmatpush2.msra.mxu0 0.0
    %790 = vmatprep.subr.mxu0 0.0
    %791 = vmatpush2.msra.mxu0 0.0
    %792 = vmatprep.subr.mxu0 0.0
    %793 = vmatpush2.msra.mxu0 0.0
    %794 = vmatprep.subr.mxu0 0.0
    %795 = vmatpush2.msra.mxu0 0.0
    %796 = vmatprep.subr.mxu0 0.0
    %797 = vmatpush2.msra.mxu0 0.0
    %798 = vmatprep.subr.mxu0 0.0
    %799 = vmatpush2.msra.mxu0 0.0
    %800 = vmatprep.mubr.f32.mxu0 0.0
    %801 = vmatmul.mubr.f32.gmra.mxu0 %v734
    %v802 = vpop.f32.mrf.mxu0
    %v803 = vadd.f32 0.0, %v802
    %v804 = vpop.f32.mrf.mxu0
    %v805 = vadd.f32 0.0, %v804
    %806 = vdwg.mxu0
    %807 = vmatprep.subr.mxu0 %v375
    %808 = vmatpush1.msra.mxu0 %v374
    %809 = vmatprep.subr.mxu0 %v371
    %810 = vmatpush1.msra.mxu0 %v370
    %811 = vmatprep.subr.mxu0 %v367
    %812 = vmatpush1.msra.mxu0 %v366
    %813 = vmatprep.subr.mxu0 %v363
    %814 = vmatpush1.msra.mxu0 %v362
    %815 = vmatprep.subr.mxu0 %v359
    %816 = vmatpush1.msra.mxu0 %v358
    %817 = vmatprep.subr.mxu0 %v355
    %818 = vmatpush1.msra.mxu0 %v354
    %819 = vmatprep.subr.mxu0 %v351
    %820 = vmatpush1.msra.mxu0 %v350
    %821 = vmatprep.subr.mxu0 %v347
    %822 = vmatpush1.msra.mxu0 %v346
    %823 = vmatprep.subr.mxu0 %v343
    %824 = vmatpush1.msra.mxu0 %v342
    %825 = vmatprep.subr.mxu0 %v339
    %826 = vmatpush1.msra.mxu0 %v338
    %827 = vmatprep.subr.mxu0 %v335
    %828 = vmatpush1.msra.mxu0 %v334
    %829 = vmatprep.subr.mxu0 %v331
    %830 = vmatpush1.msra.mxu0 %v330
    %831 = vmatprep.subr.mxu0 %v327
    %832 = vmatpush1.msra.mxu0 %v326
    %833 = vmatprep.subr.mxu0 %v323
    %834 = vmatpush1.msra.mxu0 %v322
    %835 = vmatprep.subr.mxu0 %v319
    %836 = vmatpush1.msra.mxu0 %v318
    %837 = vmatprep.subr.mxu0 %v315
    %838 = vmatpush1.msra.mxu0 %v314
    %839 = vmatprep.subr.mxu0 0.0
    %840 = vmatpush2.msra.mxu0 0.0
    %841 = vmatprep.subr.mxu0 0.0
    %842 = vmatpush2.msra.mxu0 0.0
    %843 = vmatprep.subr.mxu0 0.0
    %844 = vmatpush2.msra.mxu0 0.0
    %845 = vmatprep.subr.mxu0 0.0
    %846 = vmatpush2.msra.mxu0 0.0
    %847 = vmatprep.subr.mxu0 0.0
    %848 = vmatpush2.msra.mxu0 0.0
    %849 = vmatprep.subr.mxu0 0.0
    %850 = vmatpush2.msra.mxu0 0.0
    %851 = vmatprep.subr.mxu0 0.0
    %852 = vmatpush2.msra.mxu0 0.0
    %853 = vmatprep.subr.mxu0 0.0
    %854 = vmatpush2.msra.mxu0 0.0
    %855 = vmatprep.subr.mxu0 0.0
    %856 = vmatpush2.msra.mxu0 0.0
    %857 = vmatprep.subr.mxu0 0.0
    %858 = vmatpush2.msra.mxu0 0.0
    %859 = vmatprep.subr.mxu0 0.0
    %860 = vmatpush2.msra.mxu0 0.0
    %861 = vmatprep.subr.mxu0 0.0
    %862 = vmatpush2.msra.mxu0 0.0
    %863 = vmatprep.subr.mxu0 0.0
    %864 = vmatpush2.msra.mxu0 0.0
    %865 = vmatprep.subr.mxu0 0.0
    %866 = vmatpush2.msra.mxu0 0.0
    %867 = vmatprep.subr.mxu0 0.0
    %868 = vmatpush2.msra.mxu0 0.0
    %869 = vmatprep.subr.mxu0 0.0
    %870 = vmatpush2.msra.mxu0 0.0
    %871 = vmatprep.mubr.f32.mxu0 0.0
    %872 = vmatmul.mubr.f32.gmra.mxu0 %v734
    %v873 = vpop.f32.mrf.mxu0
    %v874 = vadd.f32 0.0, %v873
    %v875 = vpop.f32.mrf.mxu0
    %v876 = vadd.f32 0.0, %v875
    %877 = vdwg.mxu0
    %v882 = vrot.slane %v803, 4
    %v883 = vrot.slane %v805, 4
    %v884 = vrot.slane %v874, 4
    %v885 = vrot.slane %v876, 4
    %v890 = vadd.f32 %v225, %v882
    %v891 = vadd.f32 %v227, %v883
    %v892 = vadd.f32 %v302, %v884
    %v893 = vadd.f32 %v304, %v885
    %v894 = vxor.u32 %v890, 2147483648
    %v895 = vmul.f32 %v894, 1.442695
    %v896 = vpow.pop %v895
    %v897 = vadd.f32 %v896, 1.0
    %v898 = vrcp.pop %v897
    %v899 = vmul.f32 1.0, %v898
    %v900 = vxor.u32 %v891, 2147483648
    %v901 = vmul.f32 %v900, 1.442695
    %v902 = vpow.pop %v901
    %v903 = vadd.f32 %v902, 1.0
    %v904 = vrcp.pop %v903
    %v905 = vmul.f32 1.0, %v904
    %v906 = vtanh.pop %v892
    %v907 = vxor.u32 %v893, 2147483648
    %v908 = vmul.f32 %v907, 1.442695
    %v909 = vpow.pop %v908
    %v910 = vadd.f32 %v909, 1.0
    %v911 = vrcp.pop %v910
    %v912 = vmul.f32 1.0, %v911
    %v914 = vrot.slane %v729, 6
    %v916 = vmul.f32 %v905, %v914
    %v917 = vmul.f32 %v899, %v906
    %v918 = vadd.f32 %v916, %v917
    %v919 = vtanh.pop %v918
    %v920 = vmul.f32 %v912, %v919
    %921 = vst [vmem:[#allocation2] sm:$0x30] %v920
    %v923 = vrot.slane %v920, 4
    %925 = vmatprep.subr.mxu0 %v373
    %926 = vmatpush1.msra.mxu0 %v372
    %927 = vmatprep.subr.mxu0 %v369
    %928 = vmatpush1.msra.mxu0 %v368
    %929 = vmatprep.subr.mxu0 %v365
    %930 = vmatpush1.msra.mxu0 %v364
    %931 = vmatprep.subr.mxu0 %v361
    %932 = vmatpush1.msra.mxu0 %v360
    %933 = vmatprep.subr.mxu0 %v357
    %934 = vmatpush1.msra.mxu0 %v356
    %935 = vmatprep.subr.mxu0 %v353
    %936 = vmatpush1.msra.mxu0 %v352
    %937 = vmatprep.subr.mxu0 %v349
    %938 = vmatpush1.msra.mxu0 %v348
    %939 = vmatprep.subr.mxu0 %v345
    %940 = vmatpush1.msra.mxu0 %v344
    %941 = vmatprep.subr.mxu0 %v341
    %942 = vmatpush1.msra.mxu0 %v340
    %943 = vmatprep.subr.mxu0 %v337
    %944 = vmatpush1.msra.mxu0 %v336
    %945 = vmatprep.subr.mxu0 %v333
    %946 = vmatpush1.msra.mxu0 %v332
    %947 = vmatprep.subr.mxu0 %v329
    %948 = vmatpush1.msra.mxu0 %v328
    %949 = vmatprep.subr.mxu0 %v325
    %950 = vmatpush1.msra.mxu0 %v324
    %951 = vmatprep.subr.mxu0 %v321
    %952 = vmatpush1.msra.mxu0 %v320
    %953 = vmatprep.subr.mxu0 %v317
    %954 = vmatpush1.msra.mxu0 %v316
    %955 = vmatprep.subr.mxu0 %v313
    %956 = vmatpush1.msra.mxu0 %v312
    %957 = vmatprep.subr.mxu0 0.0
    %958 = vmatpush2.msra.mxu0 0.0
    %959 = vmatprep.subr.mxu0 0.0
    %960 = vmatpush2.msra.mxu0 0.0
    %961 = vmatprep.subr.mxu0 0.0
    %962 = vmatpush2.msra.mxu0 0.0
    %963 = vmatprep.subr.mxu0 0.0
    %964 = vmatpush2.msra.mxu0 0.0
    %965 = vmatprep.subr.mxu0 0.0
    %966 = vmatpush2.msra.mxu0 0.0
    %967 = vmatprep.subr.mxu0 0.0
    %968 = vmatpush2.msra.mxu0 0.0
    %969 = vmatprep.subr.mxu0 0.0
    %970 = vmatpush2.msra.mxu0 0.0
    %971 = vmatprep.subr.mxu0 0.0
    %972 = vmatpush2.msra.mxu0 0.0
    %973 = vmatprep.subr.mxu0 0.0
    %974 = vmatpush2.msra.mxu0 0.0
    %975 = vmatprep.subr.mxu0 0.0
    %976 = vmatpush2.msra.mxu0 0.0
    %977 = vmatprep.subr.mxu0 0.0
    %978 = vmatpush2.msra.mxu0 0.0
    %979 = vmatprep.subr.mxu0 0.0
    %980 = vmatpush2.msra.mxu0 0.0
    %981 = vmatprep.subr.mxu0 0.0
    %982 = vmatpush2.msra.mxu0 0.0
    %983 = vmatprep.subr.mxu0 0.0
    %984 = vmatpush2.msra.mxu0 0.0
    %985 = vmatprep.subr.mxu0 0.0
    %986 = vmatpush2.msra.mxu0 0.0
    %987 = vmatprep.subr.mxu0 0.0
    %988 = vmatpush2.msra.mxu0 0.0
    %989 = vmatprep.mubr.f32.mxu0 0.0
    %990 = vmatmul.mubr.f32.gmra.mxu0 %v923
    %v991 = vpop.f32.mrf.mxu0
    %v992 = vadd.f32 0.0, %v991
    %v993 = vpop.f32.mrf.mxu0
    %v994 = vadd.f32 0.0, %v993
    %995 = vdwg.mxu0
    %996 = vmatprep.subr.mxu0 %v375
    %997 = vmatpush1.msra.mxu0 %v374
    %998 = vmatprep.subr.mxu0 %v371
    %999 = vmatpush1.msra.mxu0 %v370
    %1000 = vmatprep.subr.mxu0 %v367
    %1001 = vmatpush1.msra.mxu0 %v366
    %1002 = vmatprep.subr.mxu0 %v363
    %1003 = vmatpush1.msra.mxu0 %v362
    %1004 = vmatprep.subr.mxu0 %v359
    %1005 = vmatpush1.msra.mxu0 %v358
    %1006 = vmatprep.subr.mxu0 %v355
    %1007 = vmatpush1.msra.mxu0 %v354
    %1008 = vmatprep.subr.mxu0 %v351
    %1009 = vmatpush1.msra.mxu0 %v350
    %1010 = vmatprep.subr.mxu0 %v347
    %1011 = vmatpush1.msra.mxu0 %v346
    %1012 = vmatprep.subr.mxu0 %v343
    %1013 = vmatpush1.msra.mxu0 %v342
    %1014 = vmatprep.subr.mxu0 %v339
    %1015 = vmatpush1.msra.mxu0 %v338
    %1016 = vmatprep.subr.mxu0 %v335
    %1017 = vmatpush1.msra.mxu0 %v334
    %1018 = vmatprep.subr.mxu0 %v331
    %1019 = vmatpush1.msra.mxu0 %v330
    %1020 = vmatprep.subr.mxu0 %v327
    %1021 = vmatpush1.msra.mxu0 %v326
    %1022 = vmatprep.subr.mxu0 %v323
    %1023 = vmatpush1.msra.mxu0 %v322
    %1024 = vmatprep.subr.mxu0 %v319
    %1025 = vmatpush1.msra.mxu0 %v318
    %1026 = vmatprep.subr.mxu0 %v315
    %1027 = vmatpush1.msra.mxu0 %v314
    %1028 = vmatprep.subr.mxu0 0.0
    %1029 = vmatpush2.msra.mxu0 0.0
    %1030 = vmatprep.subr.mxu0 0.0
    %1031 = vmatpush2.msra.mxu0 0.0
    %1032 = vmatprep.subr.mxu0 0.0
    %1033 = vmatpush2.msra.mxu0 0.0
    %1034 = vmatprep.subr.mxu0 0.0
    %1035 = vmatpush2.msra.mxu0 0.0
    %1036 = vmatprep.subr.mxu0 0.0
    %1037 = vmatpush2.msra.mxu0 0.0
    %1038 = vmatprep.subr.mxu0 0.0
    %1039 = vmatpush2.msra.mxu0 0.0
    %1040 = vmatprep.subr.mxu0 0.0
    %1041 = vmatpush2.msra.mxu0 0.0
    %1042 = vmatprep.subr.mxu0 0.0
    %1043 = vmatpush2.msra.mxu0 0.0
    %1044 = vmatprep.subr.mxu0 0.0
    %1045 = vmatpush2.msra.mxu0 0.0
    %1046 = vmatprep.subr.mxu0 0.0
    %1047 = vmatpush2.msra.mxu0 0.0
    %1048 = vmatprep.subr.mxu0 0.0
    %1049 = vmatpush2.msra.mxu0 0.0
    %1050 = vmatprep.subr.mxu0 0.0
    %1051 = vmatpush2.msra.mxu0 0.0
    %1052 = vmatprep.subr.mxu0 0.0
    %1053 = vmatpush2.msra.mxu0 0.0
    %1054 = vmatprep.subr.mxu0 0.0
    %1055 = vmatpush2.msra.mxu0 0.0
    %1056 = vmatprep.subr.mxu0 0.0
    %1057 = vmatpush2.msra.mxu0 0.0
    %1058 = vmatprep.subr.mxu0 0.0
    %1059 = vmatpush2.msra.mxu0 0.0
    %1060 = vmatprep.mubr.f32.mxu0 0.0
    %1061 = vmatmul.mubr.f32.gmra.mxu0 %v923
    %v1062 = vpop.f32.mrf.mxu0
    %v1063 = vadd.f32 0.0, %v1062
    %v1064 = vpop.f32.mrf.mxu0
    %v1065 = vadd.f32 0.0, %v1064
    %1066 = vdwg.mxu0
    %v1071 = vrot.slane %v992, 2
    %v1072 = vrot.slane %v994, 2
    %v1073 = vrot.slane %v1063, 2
    %v1074 = vrot.slane %v1065, 2
    %v1079 = vadd.f32 %v225, %v1071
    %v1080 = vadd.f32 %v227, %v1072
    %v1081 = vadd.f32 %v302, %v1073
    %v1082 = vadd.f32 %v304, %v1074
    %v1083 = vxor.u32 %v1079, 2147483648
    %v1084 = vmul.f32 %v1083, 1.442695
    %v1085 = vpow.pop %v1084
    %v1086 = vadd.f32 %v1085, 1.0
    %v1087 = vrcp.pop %v1086
    %v1088 = vmul.f32 1.0, %v1087
    %v1089 = vxor.u32 %v1080, 2147483648
    %v1090 = vmul.f32 %v1089, 1.442695
    %v1091 = vpow.pop %v1090
    %v1092 = vadd.f32 %v1091, 1.0
    %v1093 = vrcp.pop %v1092
    %v1094 = vmul.f32 1.0, %v1093
    %v1095 = vtanh.pop %v1081
    %v1096 = vxor.u32 %v1082, 2147483648
    %v1097 = vmul.f32 %v1096, 1.442695
    %v1098 = vpow.pop %v1097
    %v1099 = vadd.f32 %v1098, 1.0
    %v1100 = vrcp.pop %v1099
    %v1101 = vmul.f32 1.0, %v1100
    %v1103 = vrot.slane %v918, 6
    %v1105 = vmul.f32 %v1094, %v1103
    %v1106 = vmul.f32 %v1088, %v1095
    %v1107 = vadd.f32 %v1105, %v1106
    %v1108 = vtanh.pop %v1107
    %v1109 = vmul.f32 %v1101, %v1108
    %1110 = vst [vmem:[#allocation2] sm:$0xc0] %v1109
    %v1112 = vrot.slane %v1109, 6
    %1114 = vmatprep.subr.mxu0 %v373
    %1115 = vmatpush1.msra.mxu0 %v372
    %1116 = vmatprep.subr.mxu0 %v369
    %1117 = vmatpush1.msra.mxu0 %v368
    %1118 = vmatprep.subr.mxu0 %v365
    %1119 = vmatpush1.msra.mxu0 %v364
    %1120 = vmatprep.subr.mxu0 %v361
    %1121 = vmatpush1.msra.mxu0 %v360
    %1122 = vmatprep.subr.mxu0 %v357
    %1123 = vmatpush1.msra.mxu0 %v356
    %1124 = vmatprep.subr.mxu0 %v353
    %1125 = vmatpush1.msra.mxu0 %v352
    %1126 = vmatprep.subr.mxu0 %v349
    %1127 = vmatpush1.msra.mxu0 %v348
    %1128 = vmatprep.subr.mxu0 %v345
    %1129 = vmatpush1.msra.mxu0 %v344
    %1130 = vmatprep.subr.mxu0 %v341
    %1131 = vmatpush1.msra.mxu0 %v340
    %1132 = vmatprep.subr.mxu0 %v337
    %1133 = vmatpush1.msra.mxu0 %v336
    %1134 = vmatprep.subr.mxu0 %v333
    %1135 = vmatpush1.msra.mxu0 %v332
    %1136 = vmatprep.subr.mxu0 %v329
    %1137 = vmatpush1.msra.mxu0 %v328
    %1138 = vmatprep.subr.mxu0 %v325
    %1139 = vmatpush1.msra.mxu0 %v324
    %1140 = vmatprep.subr.mxu0 %v321
    %1141 = vmatpush1.msra.mxu0 %v320
    %1142 = vmatprep.subr.mxu0 %v317
    %1143 = vmatpush1.msra.mxu0 %v316
    %1144 = vmatprep.subr.mxu0 %v313
    %1145 = vmatpush1.msra.mxu0 %v312
    %1146 = vmatprep.subr.mxu0 0.0
    %1147 = vmatpush2.msra.mxu0 0.0
    %1148 = vmatprep.subr.mxu0 0.0
    %1149 = vmatpush2.msra.mxu0 0.0
    %1150 = vmatprep.subr.mxu0 0.0
    %1151 = vmatpush2.msra.mxu0 0.0
    %1152 = vmatprep.subr.mxu0 0.0
    %1153 = vmatpush2.msra.mxu0 0.0
    %1154 = vmatprep.subr.mxu0 0.0
    %1155 = vmatpush2.msra.mxu0 0.0
    %1156 = vmatprep.subr.mxu0 0.0
    %1157 = vmatpush2.msra.mxu0 0.0
    %1158 = vmatprep.subr.mxu0 0.0
    %1159 = vmatpush2.msra.mxu0 0.0
    %1160 = vmatprep.subr.mxu0 0.0
    %1161 = vmatpush2.msra.mxu0 0.0
    %1162 = vmatprep.subr.mxu0 0.0
    %1163 = vmatpush2.msra.mxu0 0.0
    %1164 = vmatprep.subr.mxu0 0.0
    %1165 = vmatpush2.msra.mxu0 0.0
    %1166 = vmatprep.subr.mxu0 0.0
    %1167 = vmatpush2.msra.mxu0 0.0
    %1168 = vmatprep.subr.mxu0 0.0
    %1169 = vmatpush2.msra.mxu0 0.0
    %1170 = vmatprep.subr.mxu0 0.0
    %1171 = vmatpush2.msra.mxu0 0.0
    %1172 = vmatprep.subr.mxu0 0.0
    %1173 = vmatpush2.msra.mxu0 0.0
    %1174 = vmatprep.subr.mxu0 0.0
    %1175 = vmatpush2.msra.mxu0 0.0
    %1176 = vmatprep.subr.mxu0 0.0
    %1177 = vmatpush2.msra.mxu0 0.0
    %1178 = vmatprep.mubr.f32.mxu0 0.0
    %1179 = vmatmul.mubr.f32.gmra.mxu0 %v1112
    %v1180 = vpop.f32.mrf.mxu0
    %v1181 = vadd.f32 0.0, %v1180
    %v1182 = vpop.f32.mrf.mxu0
    %v1183 = vadd.f32 0.0, %v1182
    %1184 = vdwg.mxu0
    %1185 = vmatprep.subr.mxu0 %v375
    %1186 = vmatpush1.msra.mxu0 %v374
    %1187 = vmatprep.subr.mxu0 %v371
    %1188 = vmatpush1.msra.mxu0 %v370
    %1189 = vmatprep.subr.mxu0 %v367
    %1190 = vmatpush1.msra.mxu0 %v366
    %1191 = vmatprep.subr.mxu0 %v363
    %1192 = vmatpush1.msra.mxu0 %v362
    %1193 = vmatprep.subr.mxu0 %v359
    %1194 = vmatpush1.msra.mxu0 %v358
    %1195 = vmatprep.subr.mxu0 %v355
    %1196 = vmatpush1.msra.mxu0 %v354
    %1197 = vmatprep.subr.mxu0 %v351
    %1198 = vmatpush1.msra.mxu0 %v350
    %1199 = vmatprep.subr.mxu0 %v347
    %1200 = vmatpush1.msra.mxu0 %v346
    %1201 = vmatprep.subr.mxu0 %v343
    %1202 = vmatpush1.msra.mxu0 %v342
    %1203 = vmatprep.subr.mxu0 %v339
    %1204 = vmatpush1.msra.mxu0 %v338
    %1205 = vmatprep.subr.mxu0 %v335
    %1206 = vmatpush1.msra.mxu0 %v334
    %1207 = vmatprep.subr.mxu0 %v331
    %1208 = vmatpush1.msra.mxu0 %v330
    %1209 = vmatprep.subr.mxu0 %v327
    %1210 = vmatpush1.msra.mxu0 %v326
    %1211 = vmatprep.subr.mxu0 %v323
    %1212 = vmatpush1.msra.mxu0 %v322
    %1213 = vmatprep.subr.mxu0 %v319
    %1214 = vmatpush1.msra.mxu0 %v318
    %1215 = vmatprep.subr.mxu0 %v315
    %1216 = vmatpush1.msra.mxu0 %v314
    %1217 = vmatprep.subr.mxu0 0.0
    %1218 = vmatpush2.msra.mxu0 0.0
    %1219 = vmatprep.subr.mxu0 0.0
    %1220 = vmatpush2.msra.mxu0 0.0
    %1221 = vmatprep.subr.mxu0 0.0
    %1222 = vmatpush2.msra.mxu0 0.0
    %1223 = vmatprep.subr.mxu0 0.0
    %1224 = vmatpush2.msra.mxu0 0.0
    %1225 = vmatprep.subr.mxu0 0.0
    %1226 = vmatpush2.msra.mxu0 0.0
    %1227 = vmatprep.subr.mxu0 0.0
    %1228 = vmatpush2.msra.mxu0 0.0
    %1229 = vmatprep.subr.mxu0 0.0
    %1230 = vmatpush2.msra.mxu0 0.0
    %1231 = vmatprep.subr.mxu0 0.0
    %1232 = vmatpush2.msra.mxu0 0.0
    %1233 = vmatprep.subr.mxu0 0.0
    %1234 = vmatpush2.msra.mxu0 0.0
    %1235 = vmatprep.subr.mxu0 0.0
    %1236 = vmatpush2.msra.mxu0 0.0
    %1237 = vmatprep.subr.mxu0 0.0
    %1238 = vmatpush2.msra.mxu0 0.0
    %1239 = vmatprep.subr.mxu0 0.0
    %1240 = vmatpush2.msra.mxu0 0.0
    %1241 = vmatprep.subr.mxu0 0.0
    %1242 = vmatpush2.msra.mxu0 0.0
    %1243 = vmatprep.subr.mxu0 0.0
    %1244 = vmatpush2.msra.mxu0 0.0
    %1245 = vmatprep.subr.mxu0 0.0
    %1246 = vmatpush2.msra.mxu0 0.0
    %1247 = vmatprep.subr.mxu0 0.0
    %1248 = vmatpush2.msra.mxu0 0.0
    %1249 = vmatprep.mubr.f32.mxu0 0.0
    %1250 = vmatmul.mubr.f32.gmra.mxu0 %v1112
    %v1251 = vpop.f32.mrf.mxu0
    %v1252 = vadd.f32 0.0, %v1251
    %v1253 = vpop.f32.mrf.mxu0
    %v1254 = vadd.f32 0.0, %v1253
    %1255 = vdwg.mxu0
    %v1256 = vadd.f32 %v231, %v1181
    %v1257 = vadd.f32 %v233, %v1183
    %v1258 = vadd.f32 %v308, %v1252
    %v1259 = vadd.f32 %v310, %v1254
    %v1260 = vxor.u32 %v1256, 2147483648
    %v1261 = vmul.f32 %v1260, 1.442695
    %v1262 = vpow.pop %v1261
    %v1263 = vadd.f32 %v1262, 1.0
    %v1264 = vrcp.pop %v1263
    %v1265 = vmul.f32 1.0, %v1264
    %v1266 = vxor.u32 %v1257, 2147483648
    %v1267 = vmul.f32 %v1266, 1.442695
    %v1268 = vpow.pop %v1267
    %v1269 = vadd.f32 %v1268, 1.0
    %v1270 = vrcp.pop %v1269
    %v1271 = vmul.f32 1.0, %v1270
    %v1272 = vtanh.pop %v1258
    %v1273 = vxor.u32 %v1259, 2147483648
    %v1274 = vmul.f32 %v1273, 1.442695
    %v1275 = vpow.pop %v1274
    %v1276 = vadd.f32 %v1275, 1.0
    %v1277 = vrcp.pop %v1276
    %v1278 = vmul.f32 1.0, %v1277
    %v1280 = vrot.slane %v1107, 6
    %v1282 = vmul.f32 %v1271, %v1280
    %v1283 = vmul.f32 %v1265, %v1272
    %v1284 = vadd.f32 %v1282, %v1283
    %v1285 = vtanh.pop %v1284
    %v1286 = vmul.f32 %v1278, %v1285
    %1287 = vst [vmem:[#allocation2 + $0x8] sm:$0x3] %v1286
    %1288 = vmatprep.subr.mxu0 %v373
    %1289 = vmatpush1.msra.mxu0 %v372
    %1290 = vmatprep.subr.mxu0 %v369
    %1291 = vmatpush1.msra.mxu0 %v368
    %1292 = vmatprep.subr.mxu0 %v365
    %1293 = vmatpush1.msra.mxu0 %v364
    %1294 = vmatprep.subr.mxu0 %v361
    %1295 = vmatpush1.msra.mxu0 %v360
    %1296 = vmatprep.subr.mxu0 %v357
    %1297 = vmatpush1.msra.mxu0 %v356
    %1298 = vmatprep.subr.mxu0 %v353
    %1299 = vmatpush1.msra.mxu0 %v352
    %1300 = vmatprep.subr.mxu0 %v349
    %1301 = vmatpush1.msra.mxu0 %v348
    %1302 = vmatprep.subr.mxu0 %v345
    %1303 = vmatpush1.msra.mxu0 %v344
    %1304 = vmatprep.subr.mxu0 %v341
    %1305 = vmatpush1.msra.mxu0 %v340
    %1306 = vmatprep.subr.mxu0 %v337
    %1307 = vmatpush1.msra.mxu0 %v336
    %1308 = vmatprep.subr.mxu0 %v333
    %1309 = vmatpush1.msra.mxu0 %v332
    %1310 = vmatprep.subr.mxu0 %v329
    %1311 = vmatpush1.msra.mxu0 %v328
    %1312 = vmatprep.subr.mxu0 %v325
    %1313 = vmatpush1.msra.mxu0 %v324
    %1314 = vmatprep.subr.mxu0 %v321
    %1315 = vmatpush1.msra.mxu0 %v320
    %1316 = vmatprep.subr.mxu0 %v317
    %1317 = vmatpush1.msra.mxu0 %v316
    %1318 = vmatprep.subr.mxu0 %v313
    %1319 = vmatpush1.msra.mxu0 %v312
    %1320 = vmatprep.subr.mxu0 0.0
    %1321 = vmatpush2.msra.mxu0 0.0
    %1322 = vmatprep.subr.mxu0 0.0
    %1323 = vmatpush2.msra.mxu0 0.0
    %1324 = vmatprep.subr.mxu0 0.0
    %1325 = vmatpush2.msra.mxu0 0.0
    %1326 = vmatprep.subr.mxu0 0.0
    %1327 = vmatpush2.msra.mxu0 0.0
    %1328 = vmatprep.subr.mxu0 0.0
    %1329 = vmatpush2.msra.mxu0 0.0
    %1330 = vmatprep.subr.mxu0 0.0
    %1331 = vmatpush2.msra.mxu0 0.0
    %1332 = vmatprep.subr.mxu0 0.0
    %1333 = vmatpush2.msra.mxu0 0.0
    %1334 = vmatprep.subr.mxu0 0.0
    %1335 = vmatpush2.msra.mxu0 0.0
    %1336 = vmatprep.subr.mxu0 0.0
    %1337 = vmatpush2.msra.mxu0 0.0
    %1338 = vmatprep.subr.mxu0 0.0
    %1339 = vmatpush2.msra.mxu0 0.0
    %1340 = vmatprep.subr.mxu0 0.0
    %1341 = vmatpush2.msra.mxu0 0.0
    %1342 = vmatprep.subr.mxu0 0.0
    %1343 = vmatpush2.msra.mxu0 0.0
    %1344 = vmatprep.subr.mxu0 0.0
    %1345 = vmatpush2.msra.mxu0 0.0
    %1346 = vmatprep.subr.mxu0 0.0
    %1347 = vmatpush2.msra.mxu0 0.0
    %1348 = vmatprep.subr.mxu0 0.0
    %1349 = vmatpush2.msra.mxu0 0.0
    %1350 = vmatprep.subr.mxu0 0.0
    %1351 = vmatpush2.msra.mxu0 0.0
    %1352 = vmatprep.mubr.f32.mxu0 0.0
    %1353 = vmatmul.mubr.f32.gmra.mxu0 %v1286
    %v1354 = vpop.f32.mrf.mxu0
    %v1355 = vadd.f32 0.0, %v1354
    %v1356 = vpop.f32.mrf.mxu0
    %v1357 = vadd.f32 0.0, %v1356
    %1358 = vdwg.mxu0
    %1359 = vmatprep.subr.mxu0 %v375
    %1360 = vmatpush1.msra.mxu0 %v374
    %1361 = vmatprep.subr.mxu0 %v371
    %1362 = vmatpush1.msra.mxu0 %v370
    %1363 = vmatprep.subr.mxu0 %v367
    %1364 = vmatpush1.msra.mxu0 %v366
    %1365 = vmatprep.subr.mxu0 %v363
    %1366 = vmatpush1.msra.mxu0 %v362
    %1367 = vmatprep.subr.mxu0 %v359
    %1368 = vmatpush1.msra.mxu0 %v358
    %1369 = vmatprep.subr.mxu0 %v355
    %1370 = vmatpush1.msra.mxu0 %v354
    %1371 = vmatprep.subr.mxu0 %v351
    %1372 = vmatpush1.msra.mxu0 %v350
    %1373 = vmatprep.subr.mxu0 %v347
    %1374 = vmatpush1.msra.mxu0 %v346
    %1375 = vmatprep.subr.mxu0 %v343
    %1376 = vmatpush1.msra.mxu0 %v342
    %1377 = vmatprep.subr.mxu0 %v339
    %1378 = vmatpush1.msra.mxu0 %v338
    %1379 = vmatprep.subr.mxu0 %v335
    %1380 = vmatpush1.msra.mxu0 %v334
    %1381 = vmatprep.subr.mxu0 %v331
    %1382 = vmatpush1.msra.mxu0 %v330
    %1383 = vmatprep.subr.mxu0 %v327
    %1384 = vmatpush1.msra.mxu0 %v326
    %1385 = vmatprep.subr.mxu0 %v323
    %1386 = vmatpush1.msra.mxu0 %v322
    %1387 = vmatprep.subr.mxu0 %v319
    %1388 = vmatpush1.msra.mxu0 %v318
    %1389 = vmatprep.subr.mxu0 %v315
    %1390 = vmatpush1.msra.mxu0 %v314
    %1391 = vmatprep.subr.mxu0 0.0
    %1392 = vmatpush2.msra.mxu0 0.0
    %1393 = vmatprep.subr.mxu0 0.0
    %1394 = vmatpush2.msra.mxu0 0.0
    %1395 = vmatprep.subr.mxu0 0.0
    %1396 = vmatpush2.msra.mxu0 0.0
    %1397 = vmatprep.subr.mxu0 0.0
    %1398 = vmatpush2.msra.mxu0 0.0
    %1399 = vmatprep.subr.mxu0 0.0
    %1400 = vmatpush2.msra.mxu0 0.0
    %1401 = vmatprep.subr.mxu0 0.0
    %1402 = vmatpush2.msra.mxu0 0.0
    %1403 = vmatprep.subr.mxu0 0.0
    %1404 = vmatpush2.msra.mxu0 0.0
    %1405 = vmatprep.subr.mxu0 0.0
    %1406 = vmatpush2.msra.mxu0 0.0
    %1407 = vmatprep.subr.mxu0 0.0
    %1408 = vmatpush2.msra.mxu0 0.0
    %1409 = vmatprep.subr.mxu0 0.0
    %1410 = vmatpush2.msra.mxu0 0.0
    %1411 = vmatprep.subr.mxu0 0.0
    %1412 = vmatpush2.msra.mxu0 0.0
    %1413 = vmatprep.subr.mxu0 0.0
    %1414 = vmatpush2.msra.mxu0 0.0
    %1415 = vmatprep.subr.mxu0 0.0
    %1416 = vmatpush2.msra.mxu0 0.0
    %1417 = vmatprep.subr.mxu0 0.0
    %1418 = vmatpush2.msra.mxu0 0.0
    %1419 = vmatprep.subr.mxu0 0.0
    %1420 = vmatpush2.msra.mxu0 0.0
    %1421 = vmatprep.subr.mxu0 0.0
    %1422 = vmatpush2.msra.mxu0 0.0
    %1423 = vmatprep.mubr.f32.mxu0 0.0
    %1424 = vmatmul.mubr.f32.gmra.mxu0 %v1286
    %v1425 = vpop.f32.mrf.mxu0
    %v1426 = vadd.f32 0.0, %v1425
    %v1427 = vpop.f32.mrf.mxu0
    %v1428 = vadd.f32 0.0, %v1427
    %1429 = vdwg.mxu0
    %v1434 = vrot.slane %v1355, 6
    %v1435 = vrot.slane %v1357, 6
    %v1436 = vrot.slane %v1426, 6
    %v1437 = vrot.slane %v1428, 6
    %v1442 = vadd.f32 %v231, %v1434
    %v1443 = vadd.f32 %v233, %v1435
    %v1444 = vadd.f32 %v308, %v1436
    %v1445 = vadd.f32 %v310, %v1437
    %v1446 = vxor.u32 %v1442, 2147483648
    %v1447 = vmul.f32 %v1446, 1.442695
    %v1448 = vpow.pop %v1447
    %v1449 = vadd.f32 %v1448, 1.0
    %v1450 = vrcp.pop %v1449
    %v1451 = vmul.f32 1.0, %v1450
    %v1452 = vxor.u32 %v1443, 2147483648
    %v1453 = vmul.f32 %v1452, 1.442695
    %v1454 = vpow.pop %v1453
    %v1455 = vadd.f32 %v1454, 1.0
    %v1456 = vrcp.pop %v1455
    %v1457 = vmul.f32 1.0, %v1456
    %v1458 = vtanh.pop %v1444
    %v1459 = vxor.u32 %v1445, 2147483648
    %v1460 = vmul.f32 %v1459, 1.442695
    %v1461 = vpow.pop %v1460
    %v1462 = vadd.f32 %v1461, 1.0
    %v1463 = vrcp.pop %v1462
    %v1464 = vmul.f32 1.0, %v1463
    %v1466 = vrot.slane %v1284, 6
    %v1468 = vmul.f32 %v1457, %v1466
    %v1469 = vmul.f32 %v1451, %v1458
    %v1470 = vadd.f32 %v1468, %v1469
    %v1471 = vtanh.pop %v1470
    %v1472 = vmul.f32 %v1464, %v1471
    %1473 = vst [vmem:[#allocation2 + $0x8] sm:$0xc] %v1472
    %v1475 = vrot.slane %v1472, 2
    %1477 = vmatprep.subr.mxu0 %v373
    %1478 = vmatpush1.msra.mxu0 %v372
    %1479 = vmatprep.subr.mxu0 %v369
    %1480 = vmatpush1.msra.mxu0 %v368
    %1481 = vmatprep.subr.mxu0 %v365
    %1482 = vmatpush1.msra.mxu0 %v364
    %1483 = vmatprep.subr.mxu0 %v361
    %1484 = vmatpush1.msra.mxu0 %v360
    %1485 = vmatprep.subr.mxu0 %v357
    %1486 = vmatpush1.msra.mxu0 %v356
    %1487 = vmatprep.subr.mxu0 %v353
    %1488 = vmatpush1.msra.mxu0 %v352
    %1489 = vmatprep.subr.mxu0 %v349
    %1490 = vmatpush1.msra.mxu0 %v348
    %1491 = vmatprep.subr.mxu0 %v345
    %1492 = vmatpush1.msra.mxu0 %v344
    %1493 = vmatprep.subr.mxu0 %v341
    %1494 = vmatpush1.msra.mxu0 %v340
    %1495 = vmatprep.subr.mxu0 %v337
    %1496 = vmatpush1.msra.mxu0 %v336
    %1497 = vmatprep.subr.mxu0 %v333
    %1498 = vmatpush1.msra.mxu0 %v332
    %1499 = vmatprep.subr.mxu0 %v329
    %1500 = vmatpush1.msra.mxu0 %v328
    %1501 = vmatprep.subr.mxu0 %v325
    %1502 = vmatpush1.msra.mxu0 %v324
    %1503 = vmatprep.subr.mxu0 %v321
    %1504 = vmatpush1.msra.mxu0 %v320
    %1505 = vmatprep.subr.mxu0 %v317
    %1506 = vmatpush1.msra.mxu0 %v316
    %1507 = vmatprep.subr.mxu0 %v313
    %1508 = vmatpush1.msra.mxu0 %v312
    %1509 = vmatprep.subr.mxu0 0.0
    %1510 = vmatpush2.msra.mxu0 0.0
    %1511 = vmatprep.subr.mxu0 0.0
    %1512 = vmatpush2.msra.mxu0 0.0
    %1513 = vmatprep.subr.mxu0 0.0
    %1514 = vmatpush2.msra.mxu0 0.0
    %1515 = vmatprep.subr.mxu0 0.0
    %1516 = vmatpush2.msra.mxu0 0.0
    %1517 = vmatprep.subr.mxu0 0.0
    %1518 = vmatpush2.msra.mxu0 0.0
    %1519 = vmatprep.subr.mxu0 0.0
    %1520 = vmatpush2.msra.mxu0 0.0
    %1521 = vmatprep.subr.mxu0 0.0
    %1522 = vmatpush2.msra.mxu0 0.0
    %1523 = vmatprep.subr.mxu0 0.0
    %1524 = vmatpush2.msra.mxu0 0.0
    %1525 = vmatprep.subr.mxu0 0.0
    %1526 = vmatpush2.msra.mxu0 0.0
    %1527 = vmatprep.subr.mxu0 0.0
    %1528 = vmatpush2.msra.mxu0 0.0
    %1529 = vmatprep.subr.mxu0 0.0
    %1530 = vmatpush2.msra.mxu0 0.0
    %1531 = vmatprep.subr.mxu0 0.0
    %1532 = vmatpush2.msra.mxu0 0.0
    %1533 = vmatprep.subr.mxu0 0.0
    %1534 = vmatpush2.msra.mxu0 0.0
    %1535 = vmatprep.subr.mxu0 0.0
    %1536 = vmatpush2.msra.mxu0 0.0
    %1537 = vmatprep.subr.mxu0 0.0
    %1538 = vmatpush2.msra.mxu0 0.0
    %1539 = vmatprep.subr.mxu0 0.0
    %1540 = vmatpush2.msra.mxu0 0.0
    %1541 = vmatprep.mubr.f32.mxu0 0.0
    %1542 = vmatmul.mubr.f32.gmra.mxu0 %v1475
    %v1543 = vpop.f32.mrf.mxu0
    %v1544 = vadd.f32 0.0, %v1543
    %v1545 = vpop.f32.mrf.mxu0
    %v1546 = vadd.f32 0.0, %v1545
    %1547 = vdwg.mxu0
    %1548 = vmatprep.subr.mxu0 %v375
    %1549 = vmatpush1.msra.mxu0 %v374
    %1550 = vmatprep.subr.mxu0 %v371
    %1551 = vmatpush1.msra.mxu0 %v370
    %1552 = vmatprep.subr.mxu0 %v367
    %1553 = vmatpush1.msra.mxu0 %v366
    %1554 = vmatprep.subr.mxu0 %v363
    %1555 = vmatpush1.msra.mxu0 %v362
    %1556 = vmatprep.subr.mxu0 %v359
    %1557 = vmatpush1.msra.mxu0 %v358
    %1558 = vmatprep.subr.mxu0 %v355
    %1559 = vmatpush1.msra.mxu0 %v354
    %1560 = vmatprep.subr.mxu0 %v351
    %1561 = vmatpush1.msra.mxu0 %v350
    %1562 = vmatprep.subr.mxu0 %v347
    %1563 = vmatpush1.msra.mxu0 %v346
    %1564 = vmatprep.subr.mxu0 %v343
    %1565 = vmatpush1.msra.mxu0 %v342
    %1566 = vmatprep.subr.mxu0 %v339
    %1567 = vmatpush1.msra.mxu0 %v338
    %1568 = vmatprep.subr.mxu0 %v335
    %1569 = vmatpush1.msra.mxu0 %v334
    %1570 = vmatprep.subr.mxu0 %v331
    %1571 = vmatpush1.msra.mxu0 %v330
    %1572 = vmatprep.subr.mxu0 %v327
    %1573 = vmatpush1.msra.mxu0 %v326
    %1574 = vmatprep.subr.mxu0 %v323
    %1575 = vmatpush1.msra.mxu0 %v322
    %1576 = vmatprep.subr.mxu0 %v319
    %1577 = vmatpush1.msra.mxu0 %v318
    %1578 = vmatprep.subr.mxu0 %v315
    %1579 = vmatpush1.msra.mxu0 %v314
    %1580 = vmatprep.subr.mxu0 0.0
    %1581 = vmatpush2.msra.mxu0 0.0
    %1582 = vmatprep.subr.mxu0 0.0
    %1583 = vmatpush2.msra.mxu0 0.0
    %1584 = vmatprep.subr.mxu0 0.0
    %1585 = vmatpush2.msra.mxu0 0.0
    %1586 = vmatprep.subr.mxu0 0.0
    %1587 = vmatpush2.msra.mxu0 0.0
    %1588 = vmatprep.subr.mxu0 0.0
    %1589 = vmatpush2.msra.mxu0 0.0
    %1590 = vmatprep.subr.mxu0 0.0
    %1591 = vmatpush2.msra.mxu0 0.0
    %1592 = vmatprep.subr.mxu0 0.0
    %1593 = vmatpush2.msra.mxu0 0.0
    %1594 = vmatprep.subr.mxu0 0.0
    %1595 = vmatpush2.msra.mxu0 0.0
    %1596 = vmatprep.subr.mxu0 0.0
    %1597 = vmatpush2.msra.mxu0 0.0
    %1598 = vmatprep.subr.mxu0 0.0
    %1599 = vmatpush2.msra.mxu0 0.0
    %1600 = vmatprep.subr.mxu0 0.0
    %1601 = vmatpush2.msra.mxu0 0.0
    %1602 = vmatprep.subr.mxu0 0.0
    %1603 = vmatpush2.msra.mxu0 0.0
    %1604 = vmatprep.subr.mxu0 0.0
    %1605 = vmatpush2.msra.mxu0 0.0
    %1606 = vmatprep.subr.mxu0 0.0
    %1607 = vmatpush2.msra.mxu0 0.0
    %1608 = vmatprep.subr.mxu0 0.0
    %1609 = vmatpush2.msra.mxu0 0.0
    %1610 = vmatprep.subr.mxu0 0.0
    %1611 = vmatpush2.msra.mxu0 0.0
    %1612 = vmatprep.mubr.f32.mxu0 0.0
    %1613 = vmatmul.mubr.f32.gmra.mxu0 %v1475
    %v1614 = vpop.f32.mrf.mxu0
    %v1615 = vadd.f32 0.0, %v1614
    %v1616 = vpop.f32.mrf.mxu0
    %v1617 = vadd.f32 0.0, %v1616
    %1618 = vdwg.mxu0
    %v1623 = vrot.slane %v1544, 4
    %v1624 = vrot.slane %v1546, 4
    %v1625 = vrot.slane %v1615, 4
    %v1626 = vrot.slane %v1617, 4
    %v1631 = vadd.f32 %v231, %v1623
    %v1632 = vadd.f32 %v233, %v1624
    %v1633 = vadd.f32 %v308, %v1625
    %v1634 = vadd.f32 %v310, %v1626
    %v1635 = vxor.u32 %v1631, 2147483648
    %v1636 = vmul.f32 %v1635, 1.442695
    %v1637 = vpow.pop %v1636
    %v1638 = vadd.f32 %v1637, 1.0
    %v1639 = vrcp.pop %v1638
    %v1640 = vmul.f32 1.0, %v1639
    %v1641 = vxor.u32 %v1632, 2147483648
    %v1642 = vmul.f32 %v1641, 1.442695
    %v1643 = vpow.pop %v1642
    %v1644 = vadd.f32 %v1643, 1.0
    %v1645 = vrcp.pop %v1644
    %v1646 = vmul.f32 1.0, %v1645
    %v1647 = vtanh.pop %v1633
    %v1648 = vxor.u32 %v1634, 2147483648
    %v1649 = vmul.f32 %v1648, 1.442695
    %v1650 = vpow.pop %v1649
    %v1651 = vadd.f32 %v1650, 1.0
    %v1652 = vrcp.pop %v1651
    %v1653 = vmul.f32 1.0, %v1652
    %v1655 = vrot.slane %v1470, 6
    %v1657 = vmul.f32 %v1646, %v1655
    %v1658 = vmul.f32 %v1640, %v1647
    %v1659 = vadd.f32 %v1657, %v1658
    %v1660 = vtanh.pop %v1659
    %v1661 = vmul.f32 %v1653, %v1660
    %1662 = vst [vmem:[#allocation2 + $0x8] sm:$0x30] %v1661
    %v1664 = vrot.slane %v1661, 4
    %1666 = vmatprep.subr.mxu0 %v373
    %1667 = vmatpush1.msra.mxu0 %v372
    %1668 = vmatprep.subr.mxu0 %v369
    %1669 = vmatpush1.msra.mxu0 %v368
    %1670 = vmatprep.subr.mxu0 %v365
    %1671 = vmatpush1.msra.mxu0 %v364
    %1672 = vmatprep.subr.mxu0 %v361
    %1673 = vmatpush1.msra.mxu0 %v360
    %1674 = vmatprep.subr.mxu0 %v357
    %1675 = vmatpush1.msra.mxu0 %v356
    %1676 = vmatprep.subr.mxu0 %v353
    %1677 = vmatpush1.msra.mxu0 %v352
    %1678 = vmatprep.subr.mxu0 %v349
    %1679 = vmatpush1.msra.mxu0 %v348
    %1680 = vmatprep.subr.mxu0 %v345
    %1681 = vmatpush1.msra.mxu0 %v344
    %1682 = vmatprep.subr.mxu0 %v341
    %1683 = vmatpush1.msra.mxu0 %v340
    %1684 = vmatprep.subr.mxu0 %v337
    %1685 = vmatpush1.msra.mxu0 %v336
    %1686 = vmatprep.subr.mxu0 %v333
    %1687 = vmatpush1.msra.mxu0 %v332
    %1688 = vmatprep.subr.mxu0 %v329
    %1689 = vmatpush1.msra.mxu0 %v328
    %1690 = vmatprep.subr.mxu0 %v325
    %1691 = vmatpush1.msra.mxu0 %v324
    %1692 = vmatprep.subr.mxu0 %v321
    %1693 = vmatpush1.msra.mxu0 %v320
    %1694 = vmatprep.subr.mxu0 %v317
    %1695 = vmatpush1.msra.mxu0 %v316
    %1696 = vmatprep.subr.mxu0 %v313
    %1697 = vmatpush1.msra.mxu0 %v312
    %1698 = vmatprep.subr.mxu0 0.0
    %1699 = vmatpush2.msra.mxu0 0.0
    %1700 = vmatprep.subr.mxu0 0.0
    %1701 = vmatpush2.msra.mxu0 0.0
    %1702 = vmatprep.subr.mxu0 0.0
    %1703 = vmatpush2.msra.mxu0 0.0
    %1704 = vmatprep.subr.mxu0 0.0
    %1705 = vmatpush2.msra.mxu0 0.0
    %1706 = vmatprep.subr.mxu0 0.0
    %1707 = vmatpush2.msra.mxu0 0.0
    %1708 = vmatprep.subr.mxu0 0.0
    %1709 = vmatpush2.msra.mxu0 0.0
    %1710 = vmatprep.subr.mxu0 0.0
    %1711 = vmatpush2.msra.mxu0 0.0
    %1712 = vmatprep.subr.mxu0 0.0
    %1713 = vmatpush2.msra.mxu0 0.0
    %1714 = vmatprep.subr.mxu0 0.0
    %1715 = vmatpush2.msra.mxu0 0.0
    %1716 = vmatprep.subr.mxu0 0.0
    %1717 = vmatpush2.msra.mxu0 0.0
    %1718 = vmatprep.subr.mxu0 0.0
    %1719 = vmatpush2.msra.mxu0 0.0
    %1720 = vmatprep.subr.mxu0 0.0
    %1721 = vmatpush2.msra.mxu0 0.0
    %1722 = vmatprep.subr.mxu0 0.0
    %1723 = vmatpush2.msra.mxu0 0.0
    %1724 = vmatprep.subr.mxu0 0.0
    %1725 = vmatpush2.msra.mxu0 0.0
    %1726 = vmatprep.subr.mxu0 0.0
    %1727 = vmatpush2.msra.mxu0 0.0
    %1728 = vmatprep.subr.mxu0 0.0
    %1729 = vmatpush2.msra.mxu0 0.0
    %1730 = vmatprep.mubr.f32.mxu0 0.0
    %1731 = vmatmul.mubr.f32.gmra.mxu0 %v1664
    %v1732 = vpop.f32.mrf.mxu0
    %v1733 = vadd.f32 0.0, %v1732
    %v1734 = vpop.f32.mrf.mxu0
    %v1735 = vadd.f32 0.0, %v1734
    %1736 = vdwg.mxu0
    %1737 = vmatprep.subr.mxu0 %v375
    %1738 = vmatpush1.msra.mxu0 %v374
    %1739 = vmatprep.subr.mxu0 %v371
    %1740 = vmatpush1.msra.mxu0 %v370
    %1741 = vmatprep.subr.mxu0 %v367
    %1742 = vmatpush1.msra.mxu0 %v366
    %1743 = vmatprep.subr.mxu0 %v363
    %1744 = vmatpush1.msra.mxu0 %v362
    %1745 = vmatprep.subr.mxu0 %v359
    %1746 = vmatpush1.msra.mxu0 %v358
    %1747 = vmatprep.subr.mxu0 %v355
    %1748 = vmatpush1.msra.mxu0 %v354
    %1749 = vmatprep.subr.mxu0 %v351
    %1750 = vmatpush1.msra.mxu0 %v350
    %1751 = vmatprep.subr.mxu0 %v347
    %1752 = vmatpush1.msra.mxu0 %v346
    %1753 = vmatprep.subr.mxu0 %v343
    %1754 = vmatpush1.msra.mxu0 %v342
    %1755 = vmatprep.subr.mxu0 %v339
    %1756 = vmatpush1.msra.mxu0 %v338
    %1757 = vmatprep.subr.mxu0 %v335
    %1758 = vmatpush1.msra.mxu0 %v334
    %1759 = vmatprep.subr.mxu0 %v331
    %1760 = vmatpush1.msra.mxu0 %v330
    %1761 = vmatprep.subr.mxu0 %v327
    %1762 = vmatpush1.msra.mxu0 %v326
    %1763 = vmatprep.subr.mxu0 %v323
    %1764 = vmatpush1.msra.mxu0 %v322
    %1765 = vmatprep.subr.mxu0 %v319
    %1766 = vmatpush1.msra.mxu0 %v318
    %1767 = vmatprep.subr.mxu0 %v315
    %1768 = vmatpush1.msra.mxu0 %v314
    %1769 = vmatprep.subr.mxu0 0.0
    %1770 = vmatpush2.msra.mxu0 0.0
    %1771 = vmatprep.subr.mxu0 0.0
    %1772 = vmatpush2.msra.mxu0 0.0
    %1773 = vmatprep.subr.mxu0 0.0
    %1774 = vmatpush2.msra.mxu0 0.0
    %1775 = vmatprep.subr.mxu0 0.0
    %1776 = vmatpush2.msra.mxu0 0.0
    %1777 = vmatprep.subr.mxu0 0.0
    %1778 = vmatpush2.msra.mxu0 0.0
    %1779 = vmatprep.subr.mxu0 0.0
    %1780 = vmatpush2.msra.mxu0 0.0
    %1781 = vmatprep.subr.mxu0 0.0
    %1782 = vmatpush2.msra.mxu0 0.0
    %1783 = vmatprep.subr.mxu0 0.0
    %1784 = vmatpush2.msra.mxu0 0.0
    %1785 = vmatprep.subr.mxu0 0.0
    %1786 = vmatpush2.msra.mxu0 0.0
    %1787 = vmatprep.subr.mxu0 0.0
    %1788 = vmatpush2.msra.mxu0 0.0
    %1789 = vmatprep.subr.mxu0 0.0
    %1790 = vmatpush2.msra.mxu0 0.0
    %1791 = vmatprep.subr.mxu0 0.0
    %1792 = vmatpush2.msra.mxu0 0.0
    %1793 = vmatprep.subr.mxu0 0.0
    %1794 = vmatpush2.msra.mxu0 0.0
    %1795 = vmatprep.subr.mxu0 0.0
    %1796 = vmatpush2.msra.mxu0 0.0
    %1797 = vmatprep.subr.mxu0 0.0
    %1798 = vmatpush2.msra.mxu0 0.0
    %1799 = vmatprep.subr.mxu0 0.0
    %1800 = vmatpush2.msra.mxu0 0.0
    %1801 = vmatprep.mubr.f32.mxu0 0.0
    %1802 = vmatmul.mubr.f32.gmra.mxu0 %v1664
    %v1803 = vpop.f32.mrf.mxu0
    %v1804 = vadd.f32 0.0, %v1803
    %v1805 = vpop.f32.mrf.mxu0
    %v1806 = vadd.f32 0.0, %v1805
    %1807 = vdwg.mxu0
    %v1812 = vrot.slane %v1733, 2
    %v1813 = vrot.slane %v1735, 2
    %v1814 = vrot.slane %v1804, 2
    %v1815 = vrot.slane %v1806, 2
    %v1820 = vadd.f32 %v231, %v1812
    %v1821 = vadd.f32 %v233, %v1813
    %v1822 = vadd.f32 %v308, %v1814
    %v1823 = vadd.f32 %v310, %v1815
    %v1824 = vxor.u32 %v1820, 2147483648
    %v1825 = vmul.f32 %v1824, 1.442695
    %v1826 = vpow.pop %v1825
    %v1827 = vadd.f32 %v1826, 1.0
    %v1828 = vrcp.pop %v1827
    %v1829 = vmul.f32 1.0, %v1828
    %v1830 = vxor.u32 %v1821, 2147483648
    %v1831 = vmul.f32 %v1830, 1.442695
    %v1832 = vpow.pop %v1831
    %v1833 = vadd.f32 %v1832, 1.0
    %v1834 = vrcp.pop %v1833
    %v1835 = vmul.f32 1.0, %v1834
    %v1836 = vtanh.pop %v1822
    %v1837 = vxor.u32 %v1823, 2147483648
    %v1838 = vmul.f32 %v1837, 1.442695
    %v1839 = vpow.pop %v1838
    %v1840 = vadd.f32 %v1839, 1.0
    %v1841 = vrcp.pop %v1840
    %v1842 = vmul.f32 1.0, %v1841
    %v1844 = vrot.slane %v1659, 6
    %v1846 = vmul.f32 %v1835, %v1844
    %v1847 = vmul.f32 %v1829, %v1836
    %v1848 = vadd.f32 %v1846, %v1847
    %v1849 = vtanh.pop %v1848
    %v1850 = vmul.f32 %v1842, %v1849
    %1851 = vst [vmem:[#allocation2 + $0x8] sm:$0xc0] %v1850
    %v1852 = vld [vmem:[#allocation2] sm:$0xff]
    %v1853 = vld [vmem:[#allocation2 + $0x8] sm:$0xff]
    %v1854 = vmax.f32 %v1852, 0.0
    %v1855 = vmax.f32 %v1853, 0.0
    %v1856 = vld [vmem:[#allocation9] sm:$0xff]
    %v1857 = vld [vmem:[#allocation9 + $0x8] sm:$0xff]
    %v1858 = vld [vmem:[#allocation9 + $0x10] sm:$0xff]
    %v1859 = vld [vmem:[#allocation9 + $0x18] sm:$0xff]
    %v1860 = vld [vmem:[#allocation9 + $0x20] sm:$0xff]
    %v1861 = vld [vmem:[#allocation9 + $0x28] sm:$0xff]
    %v1862 = vld [vmem:[#allocation9 + $0x30] sm:$0xff]
    %v1863 = vld [vmem:[#allocation9 + $0x38] sm:$0xff]
    %v1864 = vld [vmem:[#allocation9 + $0x40] sm:$0xff]
    %v1865 = vld [vmem:[#allocation9 + $0x48] sm:$0xff]
    %v1866 = vld [vmem:[#allocation9 + $0x50] sm:$0xff]
    %v1867 = vld [vmem:[#allocation9 + $0x58] sm:$0xff]
    %v1868 = vld [vmem:[#allocation9 + $0x60] sm:$0xff]
    %v1869 = vld [vmem:[#allocation9 + $0x68] sm:$0xff]
    %v1870 = vld [vmem:[#allocation9 + $0x70] sm:$0xff]
    %v1871 = vld [vmem:[#allocation9 + $0x78] sm:$0xff]
    %v1872 = vld [vmem:[%s5] sm:$0x1]
    %v1874 = vlaneseq
    %v1875 = vshrl.u32 %v1874, 7
    %v1876 = vsub.s32 0, %v1875
    %v1877 = vrot.slane %v1872, %v1876
    %1879 = vmatprep.subr.mxu0 0.0
    %1880 = vmatpush1.msra.mxu0 %v1871
    %1881 = vmatprep.subr.mxu0 0.0
    %1882 = vmatpush1.msra.mxu0 %v1870
    %1883 = vmatprep.subr.mxu0 0.0
    %1884 = vmatpush1.msra.mxu0 %v1869
    %1885 = vmatprep.subr.mxu0 0.0
    %1886 = vmatpush1.msra.mxu0 %v1868
    %1887 = vmatprep.subr.mxu0 0.0
    %1888 = vmatpush1.msra.mxu0 %v1867
    %1889 = vmatprep.subr.mxu0 0.0
    %1890 = vmatpush1.msra.mxu0 %v1866
    %1891 = vmatprep.subr.mxu0 0.0
    %1892 = vmatpush1.msra.mxu0 %v1865
    %1893 = vmatprep.subr.mxu0 0.0
    %1894 = vmatpush1.msra.mxu0 %v1864
    %1895 = vmatprep.subr.mxu0 0.0
    %1896 = vmatpush1.msra.mxu0 %v1863
    %1897 = vmatprep.subr.mxu0 0.0
    %1898 = vmatpush1.msra.mxu0 %v1862
    %1899 = vmatprep.subr.mxu0 0.0
    %1900 = vmatpush1.msra.mxu0 %v1861
    %1901 = vmatprep.subr.mxu0 0.0
    %1902 = vmatpush1.msra.mxu0 %v1860
    %1903 = vmatprep.subr.mxu0 0.0
    %1904 = vmatpush1.msra.mxu0 %v1859
    %1905 = vmatprep.subr.mxu0 0.0
    %1906 = vmatpush1.msra.mxu0 %v1858
    %1907 = vmatprep.subr.mxu0 0.0
    %1908 = vmatpush1.msra.mxu0 %v1857
    %1909 = vmatprep.subr.mxu0 0.0
    %1910 = vmatpush1.msra.mxu0 %v1856
    %1911 = vmatprep.subr.mxu0 0.0
    %1912 = vmatpush2.msra.mxu0 0.0
    %1913 = vmatprep.subr.mxu0 0.0
    %1914 = vmatpush2.msra.mxu0 0.0
    %1915 = vmatprep.subr.mxu0 0.0
    %1916 = vmatpush2.msra.mxu0 0.0
    %1917 = vmatprep.subr.mxu0 0.0
    %1918 = vmatpush2.msra.mxu0 0.0
    %1919 = vmatprep.subr.mxu0 0.0
    %1920 = vmatpush2.msra.mxu0 0.0
    %1921 = vmatprep.subr.mxu0 0.0
    %1922 = vmatpush2.msra.mxu0 0.0
    %1923 = vmatprep.subr.mxu0 0.0
    %1924 = vmatpush2.msra.mxu0 0.0
    %1925 = vmatprep.subr.mxu0 0.0
    %1926 = vmatpush2.msra.mxu0 0.0
    %1927 = vmatprep.subr.mxu0 0.0
    %1928 = vmatpush2.msra.mxu0 0.0
    %1929 = vmatprep.subr.mxu0 0.0
    %1930 = vmatpush2.msra.mxu0 0.0
    %1931 = vmatprep.subr.mxu0 0.0
    %1932 = vmatpush2.msra.mxu0 0.0
    %1933 = vmatprep.subr.mxu0 0.0
    %1934 = vmatpush2.msra.mxu0 0.0
    %1935 = vmatprep.subr.mxu0 0.0
    %1936 = vmatpush2.msra.mxu0 0.0
    %1937 = vmatprep.subr.mxu0 0.0
    %1938 = vmatpush2.msra.mxu0 0.0
    %1939 = vmatprep.subr.mxu0 0.0
    %1940 = vmatpush2.msra.mxu0 0.0
    %1941 = vmatprep.subr.mxu0 0.0
    %1942 = vmatpush2.msra.mxu0 0.0
    %1943 = vmatprep.mubr.f32.mxu0 0.0
    %1944 = vmatmul.mubr.f32.gmra.mxu0 %v1854
    %v1945 = vpop.f32.mrf.mxu0
    %v1946 = vadd.f32 %v1877, %v1945
    %v1947 = vpop.f32.mrf.mxu0
    %1948 = vmatprep.mubr.f32.mxu0 0.0
    %1949 = vmatmul.mubr.f32.gmra.mxu0 %v1855
    %v1950 = vpop.f32.mrf.mxu0
    %v1951 = vadd.f32 %v1877, %v1950
    %v1952 = vpop.f32.mrf.mxu0
    %1953 = vdwg.mxu0
    %v1954 = vmax.f32 %v1946, 0.0
    %v1955 = vmax.f32 %v1951, 0.0
    %v1956 = vld [vmem:[#allocation11] sm:$0xff]
    %v1957 = vld [vmem:[#allocation11 + $0x8] sm:$0xff]
    %v1958 = vld [vmem:[#allocation11 + $0x10] sm:$0xff]
    %v1959 = vld [vmem:[#allocation11 + $0x18] sm:$0xff]
    %v1960 = vld [vmem:[#allocation11 + $0x20] sm:$0xff]
    %v1961 = vld [vmem:[#allocation11 + $0x28] sm:$0xff]
    %v1962 = vld [vmem:[#allocation11 + $0x30] sm:$0xff]
    %v1963 = vld [vmem:[#allocation11 + $0x38] sm:$0xff]
    %v1964 = vld [vmem:[#allocation11 + $0x40] sm:$0xff]
    %v1965 = vld [vmem:[#allocation11 + $0x48] sm:$0xff]
    %v1966 = vld [vmem:[#allocation11 + $0x50] sm:$0xff]
    %v1967 = vld [vmem:[#allocation11 + $0x58] sm:$0xff]
    %v1968 = vld [vmem:[#allocation11 + $0x60] sm:$0xff]
    %v1969 = vld [vmem:[#allocation11 + $0x68] sm:$0xff]
    %v1970 = vld [vmem:[#allocation11 + $0x70] sm:$0xff]
    %v1971 = vld [vmem:[#allocation11 + $0x78] sm:$0xff]
    %v1972 = vld [vmem:[%s7] sm:$0x1]
    %v1974 = vlaneseq
    %v1975 = vshrl.u32 %v1974, 7
    %v1976 = vsub.s32 0, %v1975
    %v1977 = vrot.slane %v1972, %v1976
    %1979 = vmatprep.subr.mxu0 0.0
    %1980 = vmatpush1.msra.mxu0 %v1971
    %1981 = vmatprep.subr.mxu0 0.0
    %1982 = vmatpush1.msra.mxu0 %v1970
    %1983 = vmatprep.subr.mxu0 0.0
    %1984 = vmatpush1.msra.mxu0 %v1969
    %1985 = vmatprep.subr.mxu0 0.0
    %1986 = vmatpush1.msra.mxu0 %v1968
    %1987 = vmatprep.subr.mxu0 0.0
    %1988 = vmatpush1.msra.mxu0 %v1967
    %1989 = vmatprep.subr.mxu0 0.0
    %1990 = vmatpush1.msra.mxu0 %v1966
    %1991 = vmatprep.subr.mxu0 0.0
    %1992 = vmatpush1.msra.mxu0 %v1965
    %1993 = vmatprep.subr.mxu0 0.0
    %1994 = vmatpush1.msra.mxu0 %v1964
    %1995 = vmatprep.subr.mxu0 0.0
    %1996 = vmatpush1.msra.mxu0 %v1963
    %1997 = vmatprep.subr.mxu0 0.0
    %1998 = vmatpush1.msra.mxu0 %v1962
    %1999 = vmatprep.subr.mxu0 0.0
    %2000 = vmatpush1.msra.mxu0 %v1961
    %2001 = vmatprep.subr.mxu0 0.0
    %2002 = vmatpush1.msra.mxu0 %v1960
    %2003 = vmatprep.subr.mxu0 0.0
    %2004 = vmatpush1.msra.mxu0 %v1959
    %2005 = vmatprep.subr.mxu0 0.0
    %2006 = vmatpush1.msra.mxu0 %v1958
    %2007 = vmatprep.subr.mxu0 0.0
    %2008 = vmatpush1.msra.mxu0 %v1957
    %2009 = vmatprep.subr.mxu0 0.0
    %2010 = vmatpush1.msra.mxu0 %v1956
    %2011 = vmatprep.subr.mxu0 0.0
    %2012 = vmatpush2.msra.mxu0 0.0
    %2013 = vmatprep.subr.mxu0 0.0
    %2014 = vmatpush2.msra.mxu0 0.0
    %2015 = vmatprep.subr.mxu0 0.0
    %2016 = vmatpush2.msra.mxu0 0.0
    %2017 = vmatprep.subr.mxu0 0.0
    %2018 = vmatpush2.msra.mxu0 0.0
    %2019 = vmatprep.subr.mxu0 0.0
    %2020 = vmatpush2.msra.mxu0 0.0
    %2021 = vmatprep.subr.mxu0 0.0
    %2022 = vmatpush2.msra.mxu0 0.0
    %2023 = vmatprep.subr.mxu0 0.0
    %2024 = vmatpush2.msra.mxu0 0.0
    %2025 = vmatprep.subr.mxu0 0.0
    %2026 = vmatpush2.msra.mxu0 0.0
    %2027 = vmatprep.subr.mxu0 0.0
    %2028 = vmatpush2.msra.mxu0 0.0
    %2029 = vmatprep.subr.mxu0 0.0
    %2030 = vmatpush2.msra.mxu0 0.0
    %2031 = vmatprep.subr.mxu0 0.0
    %2032 = vmatpush2.msra.mxu0 0.0
    %2033 = vmatprep.subr.mxu0 0.0
    %2034 = vmatpush2.msra.mxu0 0.0
    %2035 = vmatprep.subr.mxu0 0.0
    %2036 = vmatpush2.msra.mxu0 0.0
    %2037 = vmatprep.subr.mxu0 0.0
    %2038 = vmatpush2.msra.mxu0 0.0
    %2039 = vmatprep.subr.mxu0 0.0
    %2040 = vmatpush2.msra.mxu0 0.0
    %2041 = vmatprep.subr.mxu0 0.0
    %2042 = vmatpush2.msra.mxu0 0.0
    %2043 = vmatprep.mubr.f32.mxu0 0.0
    %2044 = vmatmul.mubr.f32.gmra.mxu0 %v1954
    %v2045 = vpop.f32.mrf.mxu0
    %v2046 = vadd.f32 %v1977, %v2045
    %v2047 = vpop.f32.mrf.mxu0
    %2048 = vmatprep.mubr.f32.mxu0 0.0
    %2049 = vmatmul.mubr.f32.gmra.mxu0 %v1955
    %v2050 = vpop.f32.mrf.mxu0
    %v2051 = vadd.f32 %v1977, %v2050
    %v2052 = vpop.f32.mrf.mxu0
    %2053 = vdwg.mxu0
    %2054 = vst [vmem:[#allocation12] sm:$0xff] %v2046
    %2055 = vst [vmem:[#allocation12 + $0x8] sm:$0xff] %v2051
    // Predicated region
    $region54: #{tpu_custom_call.1} parent=1 // pred_check
      _
    $region55: #{tpu_custom_call.1} parent=1 // pred_check_branch
      %2057 = sbr.rel (0) target = $region57
    $region56: #{tpu_custom_call.1} parent=1 // pred_region
      %s2059 = ssub.s32 256, 256
      %2060 = vsyncadd [#allocation5], %s2059
      %s2061 = sshll.u32 [#allocation12], 4
      %s2062 = int_to_ptr.vmem [resolvable:$true] %s2061
      %2067 = dma.vmem_to_hbm [thread:$0]  %s2062, 256, %s8, [#allocation5], 128, 128, 8
    $region57: #{tpu_custom_call.1} parent=1 // pred_fallthru
      _
    // Predicated region
    $region58: #{tpu_custom_call.1} parent=1 // pred_check
      _
    $region59: #{tpu_custom_call.1} parent=1 // pred_check_branch
      %2069 = sbr.rel (0) target = $region61
    $region60: #{tpu_custom_call.1} parent=1 // pred_region
      %2070 = dma.done [#allocation5], 256
    $region61: #{tpu_custom_call.1} parent=1 // pred_fallthru
      _
    %2071 = vsyncpa [#allocation4], 1
    %2072 = vsyncpa [#allocation7], 1
    %2073 = vsyncpa [#allocation10], 1
    %2074 = vsyncpa [#allocation5], 1

</llo_original>
